<compile_context>
chip_gen: v7x
topology: tpu7x:2x2x1
jax: 0.10.0
libtpu: 0.0.40
codegen_flags: <defaults>
</compile_context>

<pallas_src>
import functools

import numpy as np
import jax
import jax.numpy as jnp
from jax import lax
from jax.experimental import pallas as pl
from jax.experimental.pallas import tpu as pltpu


# ----------------------------------------------------------------------------- 
# small helpers: constant div/mod lowering to bit ops for power-of-two divisors
# -----------------------------------------------------------------------------
def _is_pow2(n):
    return n > 0 and (n & (n - 1)) == 0


def _mod_c(a, m):
    return (a & (m - 1)) if _is_pow2(m) else a % m


def _div_c(a, m):
    return (a >> (int(m).bit_length() - 1)) if _is_pow2(m) else a // m


# -----------------------------------------------------------------------------
# Fused G2Conv2d4 kernel: pool(x,x) -> conv1 -> pool(conv1,x) -> conv2
#   All tensors are lane-dense (rows = Nb*H sublanes, lanes = W*C).
#   Channel chunk k = c // (C//4) selects the pooled quadrant:
#     0: TopLeft {i'>=i, j'>=j}   1: TopRight    {i'>=i, j'<=j}
#     2: BottomLeft {i'<=i,j'>=j} 3: BottomRight {i'<=i, j'<=j}
# -----------------------------------------------------------------------------
def _g2conv4_kernel(x_ref, bw1_ref, b1_ref, bw2_ref, b2_ref, o_ref,
                    *, Nb, H, W, C, KH, KW, pad):
    R = Nb * H
    WC = W * C
    cc = C // 4
    f32 = jnp.float32

    x = x_ref[...].astype(f32)                    # (R, WC): input == guide

    # ---- coordinate / direction tensors, hoisted once and reused everywhere
    lane = lax.broadcasted_iota(jnp.int32, (R, WC), 1)
    row = lax.broadcasted_iota(jnp.int32, (R, WC), 0)
    c_idx = _mod_c(lane, C)                       # channel index within C
    w_col = _div_c(lane, C)                       # W coordinate of each lane
    h_row = _mod_c(row, H)                        # within-image row (batched rows)
    h_suf = c_idx < 2 * cc                        # chunks 0,1: scan towards i' >= i
    w_suf = _mod_c(c_idx, 2 * cc) < cc            # chunks 0,2: scan towards j' >= j

    def guided_scan(v, g, coord, suf, extent, unit, axis):
        """Hillis-Steele guided-argmax scan along `axis` (4 rolls per step).

        coord: within-image logical coordinate along the scanned axis.
        suf:   per-lane direction (True = towards larger coords).
        Roll by +s*unit brings the coord-s neighbour, roll by -s*unit the
        coord+s neighbour (pltpu.roll == np.roll semantics); the scalar-compare
        masks encode edge validity (and image boundaries for batched rows).
        Ties (>=) prefer the element farther from the anchor.
        """
        n = v.shape[axis]
        pre = jnp.logical_not(suf)
        s = 1
        while s < extent:
            sh_pre = (s * unit) % n               # brings coord - s
            sh_suf = (-s * unit) % n              # brings coord + s
            ok_pre = jnp.logical_and(pre, coord >= s)
            ok_suf = jnp.logical_and(suf, coord < extent - s)
            if sh_pre == sh_suf:                  # the two rolls coincide
                g_r = pltpu.roll(g, sh_pre, axis)
                v_r = pltpu.roll(v, sh_pre, axis)
                take = jnp.logical_and(jnp.logical_or(ok_pre, ok_suf), g_r >= g)
                g = jnp.where(take, g_r, g)
                v = jnp.where(take, v_r, v)
            else:
                g_p = pltpu.roll(g, sh_pre, axis)
                v_p = pltpu.roll(v, sh_pre, axis)
                g_s = pltpu.roll(g, sh_suf, axis)
                v_s = pltpu.roll(v, sh_suf, axis)
                t_p = jnp.logical_and(ok_pre, g_p >= g)
                t_s = jnp.logical_and(ok_suf, g_s >= g)
                g = jnp.where(t_p, g_p, jnp.where(t_s, g_s, g))
                v = jnp.where(t_p, v_p, jnp.where(t_s, v_s, v))
            s *= 2
        return v, g

    def pool4(v, g):
        v, g = guided_scan(v, g, h_row, h_suf, H, 1, 0)   # along H (sublanes)
        v, _ = guided_scan(v, g, w_col, w_suf, W, C, 1)   # along W (lane stride C)
        return v

    def conv(v, bw_ref, b_ref):
        """Stride-1 'same' Conv2d, fully lane-dense.

        Each (dh, dw) tap is the input rolled by the tap offset with its halo
        zeroed by a static validity mask; the 9 taps are concatenated along
        lanes and hit the MXU once against the block-diagonal weight
        (KH*KW*W*C, W*C), yielding a lane-dense (R, W*C) result directly.
        """
        slabs = []
        for dh in range(KH):
            oh = dh - pad
            for dw in range(KW):
                ow = dw - pad
                s = v
                if oh:
                    s = pltpu.roll(s, (-oh) % R, 0)
                if ow:
                    s = pltpu.roll(s, (-ow * C) % WC, 1)
                conds = []
                if oh < 0:
                    conds.append(h_row >= -oh)
                elif oh > 0:
                    conds.append(h_row < H - oh)
                if ow < 0:
                    conds.append(w_col >= -ow)
                elif ow > 0:
                    conds.append(w_col < W - ow)
                if conds:
                    cond = conds[0]
                    for extra in conds[1:]:
                        cond = jnp.logical_and(cond, extra)
                    s = jnp.where(cond, s, 0.0)
                slabs.append(s)
        col = jnp.concatenate(slabs, axis=1)               # (R, KH*KW*W*C)
        acc = jnp.dot(col, bw_ref[...].astype(f32),
                      preferred_element_type=f32)          # (R, W*C)
        return acc + b_ref[...].astype(f32)

    # layer 1: guide is x itself (one DMA serves input and guide)
    c1 = conv(pool4(x, x), bw1_ref, b1_ref)
    # layer 2: guide is still the ORIGINAL x (module: conv2(conv1, guide=x))
    c2 = conv(pool4(c1, x), bw2_ref, b2_ref)

    o_ref[...] = c2.astype(o_ref.dtype)                    # full-width lane-dense store


# -----------------------------------------------------------------------------
# Wrapper
# -----------------------------------------------------------------------------
def _blockdiag_weight(w_hwio, W):
    """(KH,KW,Cin,Cout) HWIO -> (KH*KW*W*Cin, W*Cout) block-diagonal matmul RHS.

    Lane order on both sides is (w, channel); the per-tap (Cin, Cout) block sits
    on the w-diagonal so one lane-dense matmul applies the conv to a whole row.
    """
    KH, KW, Ci, Co = w_hwio.shape
    eye = jnp.eye(W, dtype=w_hwio.dtype)
    bw = jnp.einsum("tio,wv->twivo", w_hwio.reshape(KH * KW, Ci, Co), eye)
    return bw.reshape(KH * KW * W * Ci, W * Co)


def _pick_batch_tile(N, H, W, C, vmem_budget=8 * 1024 * 1024):
    """Images per grid step: keep >= 2 grid steps (megacore on v7x) and keep the
    ~28 live f32 copies of an image comfortably inside the VMEM budget."""
    per_img = H * W * C * 4
    cap = max(1, vmem_budget // (28 * per_img))
    if N >= 2:
        cap = min(cap, N // 2)
    nb = 1
    for d in range(1, N + 1):
        if N % d == 0 and d <= cap:
            nb = d
    if nb < N and (nb * H) % 8 != 0:     # block sublane alignment
        nb = N
    return nb


def g2conv2d4(x_nchw, params, *, padding):
    """G2Conv2d4 forward (PyTorch NCHW module) via one fused Pallas call.

    params: w1, w2 in HWIO (KH, KW, C, C); b1, b2 of shape (C,).
    """
    N, C, H, W = x_nchw.shape
    KH, KW, Ci, Co = params["w1"].shape
    assert Ci == C and Co == C and C % 4 == 0, "in==out channels, divisible by 4"
    assert params["w2"].shape == (KH, KW, C, C)
    assert KH == KW and 2 * padding == KH - 1, "chaining conv1 -> pool2 needs 'same' conv"
    WC = W * C
    K = KH * KW * WC

    # the only two relayouts left in the whole forward: NCHW -> lane-dense NHWC
    # rows here, and the inverse on the way out.
    x_ld = jnp.transpose(x_nchw, (0, 2, 3, 1)).reshape(N * H, WC)

    bw1 = _blockdiag_weight(params["w1"], W)     # in a real module: precompute once
    bw2 = _blockdiag_weight(params["w2"], W)
    b1 = jnp.tile(params["b1"].reshape(1, C), (1, W))   # (1, W*C) lane-dense bias
    b2 = jnp.tile(params["b2"].reshape(1, C), (1, W))

    Nb = _pick_batch_tile(N, H, W, C)

    out = pl.pallas_call(
        functools.partial(_g2conv4_kernel, Nb=Nb, H=H, W=W, C=C, KH=KH, KW=KW,
                          pad=padding),
        out_shape=jax.ShapeDtypeStruct((N * H, WC), x_nchw.dtype),
        grid_spec=pltpu.PrefetchScalarGridSpec(
            num_scalar_prefetch=0,
            grid=(N // Nb,),
            in_specs=[
                pl.BlockSpec((Nb * H, WC), lambda n: (n, 0)),
                pl.BlockSpec((K, WC), lambda n: (0, 0)),
                pl.BlockSpec((1, WC), lambda n: (0, 0)),
                pl.BlockSpec((K, WC), lambda n: (0, 0)),
                pl.BlockSpec((1, WC), lambda n: (0, 0)),
            ],
            out_specs=pl.BlockSpec((Nb * H, WC), lambda n: (n, 0)),
        ),
        compiler_params=pltpu.CompilerParams(
            dimension_semantics=("parallel",),
            vmem_limit_bytes=32 * 1024 * 1024,
        ),
    )(x_ld, bw1, b1, bw2, b2)

    return jnp.transpose(out.reshape(N, H, W, C), (0, 3, 1, 2))   # back to NCHW


# -----------------------------------------------------------------------------
# Pure-JAX reference (correctness check of the fused kernel)
# -----------------------------------------------------------------------------
_FLIPS = [(False, False),  # chunk 0: TopLeftPool     (G1)
          (False, True),   # chunk 1: TopRightPool    (G2)
          (True, False),   # chunk 2: BottomLeftPool  (G3)
          (True, True)]    # chunk 3: BottomRightPool (G4)


def _flip(a, fh, fw):
    if fh:
        a = jnp.flip(a, axis=1)
    if fw:
        a = jnp.flip(a, axis=2)
    return a


def _ref_guided_pool(x, g):
    def combine(a, b):
        ga, xa = a
        gb, xb = b
        take = gb > ga
        return jnp.where(take, gb, ga), jnp.where(take, xb, xa)

    def suffix(xv, gv, axis):
        xr, gr = jnp.flip(xv, axis), jnp.flip(gv, axis)
        gs, xs = lax.associative_scan(combine, (gr, xr), axis=axis)
        return jnp.flip(xs, axis), jnp.flip(gs, axis)

    vx, vg = suffix(x, g, axis=1)
    ox, _ = suffix(vx, vg, axis=2)
    return ox


def _ref_conv(x, w, b, padding):
    out = lax.conv_general_dilated(
        x, w, window_strides=(1, 1),
        padding=[(padding, padding), (padding, padding)],
        dimension_numbers=("NHWC", "HWIO", "NHWC"))
    return out + b


def _ref_gconv(x, guide, w, b, padding):
    cc = x.shape[-1] // 4
    outs = []
    for i, (fh, fw) in enumerate(_FLIPS):
        xi = _flip(x[..., i * cc:(i + 1) * cc], fh, fw)
        gi = _flip(guide[..., i * cc:(i + 1) * cc], fh, fw)
        outs.append(_flip(_ref_guided_pool(xi, gi), fh, fw))
    return _ref_conv(jnp.concatenate(outs, -1), w, b, padding)


# -----------------------------------------------------------------------------
if __name__ == "__main__":
    # Module config: GConv2d4(in_channels=8, out_channels=8, kernel_size=3, padding=1)
    B, C, H, W = 2, 8, 16, 16      # NCHW, channels divisible by 4
    KH = KW = 3
    PAD = 1

    key = jax.random.PRNGKey(0)
    k1, k2, k3, k4, kx = jax.random.split(key, 5)
    bound = 1.0 / np.sqrt(C * KH * KW)   # PyTorch-like uniform init scale
    params = {
        "w1": jax.random.uniform(k1, (KH, KW, C, C), jnp.float32, -bound, bound),
        "b1": jax.random.uniform(k2, (C,), jnp.float32, -bound, bound),
        "w2": jax.random.uniform(k3, (KH, KW, C, C), jnp.float32, -bound, bound),
        "b2": jax.random.uniform(k4, (C,), jnp.float32, -bound, bound),
    }
    x_nchw = jax.random.normal(kx, (B, C, H, W), jnp.float32)

    fwd = jax.jit(functools.partial(g2conv2d4, padding=PAD))
    out_nchw = jax.block_until_ready(fwd(x_nchw, params))

    # Reference check (NHWC reference, transposed to NCHW).
    # Note: on exact guide ties the kernel prefers the element farther from the
    # anchor; tie-free random f32 inputs make this equivalent to the reference.
    x_nhwc = jnp.transpose(x_nchw, (0, 2, 3, 1))
    r1 = _ref_gconv(x_nhwc, x_nhwc, params["w1"], params["b1"], PAD)
    r2 = _ref_gconv(r1, x_nhwc, params["w2"], params["b2"], PAD)
    ref_nchw = jax.block_until_ready(jnp.transpose(r2, (0, 3, 1, 2)))
    np.testing.assert_allclose(np.asarray(out_nchw), np.asarray(ref_nchw),
                               rtol=1e-4, atol=1e-4)
    assert out_nchw.shape == (B, C, H, W)
    print("KERNEL_OK")
</pallas_src>

<mosaic_0001>
module attributes {stable_mosaic.version = 11 : i64} {
  func.func @_g2conv4_kernel(%arg0: i32, %arg1: memref<16x128xf32, #tpu.memory_space<vmem>>, %arg2: memref<1152x128xf32, #tpu.memory_space<vmem>>, %arg3: memref<1x128xf32, #tpu.memory_space<vmem>>, %arg4: memref<1152x128xf32, #tpu.memory_space<vmem>>, %arg5: memref<1x128xf32, #tpu.memory_space<vmem>>, %arg6: memref<16x128xf32, #tpu.memory_space<vmem>>) attributes {dimension_semantics = [#tpu.dimension_semantics<parallel>], iteration_bounds = array<i64: 2>, scalar_prefetch = 0 : i64, scratch_operands = 0 : i64, tpu.core_type = #tpu.core_type<tc>, window_params = [{transform_indices = @transform_0, window_bounds = array<i64: 16, 128>}, {pipeline_mode = #tpu.pipeline_mode<synchronous>, transform_indices = @transform_1, window_bounds = array<i64: 1152, 128>}, {pipeline_mode = #tpu.pipeline_mode<synchronous>, transform_indices = @transform_2, window_bounds = array<i64: 1, 128>}, {pipeline_mode = #tpu.pipeline_mode<synchronous>, transform_indices = @transform_3, window_bounds = array<i64: 1152, 128>}, {pipeline_mode = #tpu.pipeline_mode<synchronous>, transform_indices = @transform_4, window_bounds = array<i64: 1, 128>}, {transform_indices = @transform_5, window_bounds = array<i64: 16, 128>}]} {
    %c0 = arith.constant 0 : index
    %c0_0 = arith.constant 0 : index
    %0 = vector.load %arg1[%c0, %c0_0] : memref<16x128xf32, #tpu.memory_space<vmem>>, vector<16x128xf32>
    %1 = tpu.iota {dimensions = array<i32: 1>} : vector<16x128xi32>
    %2 = tpu.iota {dimensions = array<i32: 0>} : vector<16x128xi32>
    %c7_i32 = arith.constant 7 : i32
    %3 = vector.broadcast %c7_i32 : i32 to vector<16x128xi32>
    %4 = arith.andi %1, %3 : vector<16x128xi32>
    %c3_i32 = arith.constant 3 : i32
    %5 = vector.broadcast %c3_i32 : i32 to vector<16x128xi32>
    %6 = arith.shrsi %1, %5 : vector<16x128xi32>
    %c15_i32 = arith.constant 15 : i32
    %7 = vector.broadcast %c15_i32 : i32 to vector<16x128xi32>
    %8 = arith.andi %2, %7 : vector<16x128xi32>
    %c4_i32 = arith.constant 4 : i32
    %9 = vector.broadcast %c4_i32 : i32 to vector<16x128xi32>
    %10 = arith.cmpi slt, %4, %9 : vector<16x128xi32>
    %c3_i32_1 = arith.constant 3 : i32
    %11 = vector.broadcast %c3_i32_1 : i32 to vector<16x128xi32>
    %12 = arith.andi %4, %11 : vector<16x128xi32>
    %c2_i32 = arith.constant 2 : i32
    %13 = vector.broadcast %c2_i32 : i32 to vector<16x128xi32>
    %14 = arith.cmpi slt, %12, %13 : vector<16x128xi32>
    %cst = arith.constant dense<true> : vector<16x128xi1>
    %15 = arith.xori %10, %cst : vector<16x128xi1>
    %c1_i32 = arith.constant 1 : i32
    %16 = vector.broadcast %c1_i32 : i32 to vector<16x128xi32>
    %17 = arith.cmpi sge, %8, %16 : vector<16x128xi32>
    %18 = arith.andi %15, %17 : vector<16x128xi1>
    %c15_i32_2 = arith.constant 15 : i32
    %19 = vector.broadcast %c15_i32_2 : i32 to vector<16x128xi32>
    %20 = arith.cmpi slt, %8, %19 : vector<16x128xi32>
    %21 = arith.andi %10, %20 : vector<16x128xi1>
    %c1_i32_3 = arith.constant 1 : i32
    %22 = tpu.dynamic_rotate %0 by %c1_i32_3 dim 0 : vector<16x128xf32>, i32 -> vector<16x128xf32>
    %c1_i32_4 = arith.constant 1 : i32
    %23 = tpu.dynamic_rotate %0 by %c1_i32_4 dim 0 : vector<16x128xf32>, i32 -> vector<16x128xf32>
    %c15_i32_5 = arith.constant 15 : i32
    %24 = tpu.dynamic_rotate %0 by %c15_i32_5 dim 0 : vector<16x128xf32>, i32 -> vector<16x128xf32>
    %c15_i32_6 = arith.constant 15 : i32
    %25 = tpu.dynamic_rotate %0 by %c15_i32_6 dim 0 : vector<16x128xf32>, i32 -> vector<16x128xf32>
    %26 = arith.cmpf oge, %22, %0 : vector<16x128xf32>
    %27 = arith.andi %18, %26 : vector<16x128xi1>
    %28 = arith.cmpf oge, %24, %0 : vector<16x128xf32>
    %29 = arith.andi %21, %28 : vector<16x128xi1>
    %30 = arith.select %29, %24, %0 : vector<16x128xi1>, vector<16x128xf32>
    %31 = arith.select %27, %22, %30 : vector<16x128xi1>, vector<16x128xf32>
    %32 = arith.select %29, %25, %0 : vector<16x128xi1>, vector<16x128xf32>
    %33 = arith.select %27, %23, %32 : vector<16x128xi1>, vector<16x128xf32>
    %c2_i32_7 = arith.constant 2 : i32
    %34 = vector.broadcast %c2_i32_7 : i32 to vector<16x128xi32>
    %35 = arith.cmpi sge, %8, %34 : vector<16x128xi32>
    %36 = arith.andi %15, %35 : vector<16x128xi1>
    %c14_i32 = arith.constant 14 : i32
    %37 = vector.broadcast %c14_i32 : i32 to vector<16x128xi32>
    %38 = arith.cmpi slt, %8, %37 : vector<16x128xi32>
    %39 = arith.andi %10, %38 : vector<16x128xi1>
    %c2_i32_8 = arith.constant 2 : i32
    %40 = tpu.dynamic_rotate %31 by %c2_i32_8 dim 0 : vector<16x128xf32>, i32 -> vector<16x128xf32>
    %c2_i32_9 = arith.constant 2 : i32
    %41 = tpu.dynamic_rotate %33 by %c2_i32_9 dim 0 : vector<16x128xf32>, i32 -> vector<16x128xf32>
    %c14_i32_10 = arith.constant 14 : i32
    %42 = tpu.dynamic_rotate %31 by %c14_i32_10 dim 0 : vector<16x128xf32>, i32 -> vector<16x128xf32>
    %c14_i32_11 = arith.constant 14 : i32
    %43 = tpu.dynamic_rotate %33 by %c14_i32_11 dim 0 : vector<16x128xf32>, i32 -> vector<16x128xf32>
    %44 = arith.cmpf oge, %40, %31 : vector<16x128xf32>
    %45 = arith.andi %36, %44 : vector<16x128xi1>
    %46 = arith.cmpf oge, %42, %31 : vector<16x128xf32>
    %47 = arith.andi %39, %46 : vector<16x128xi1>
    %48 = arith.select %47, %42, %31 : vector<16x128xi1>, vector<16x128xf32>
    %49 = arith.select %45, %40, %48 : vector<16x128xi1>, vector<16x128xf32>
    %50 = arith.select %47, %43, %33 : vector<16x128xi1>, vector<16x128xf32>
    %51 = arith.select %45, %41, %50 : vector<16x128xi1>, vector<16x128xf32>
    %c4_i32_12 = arith.constant 4 : i32
    %52 = vector.broadcast %c4_i32_12 : i32 to vector<16x128xi32>
    %53 = arith.cmpi sge, %8, %52 : vector<16x128xi32>
    %54 = arith.andi %15, %53 : vector<16x128xi1>
    %c12_i32 = arith.constant 12 : i32
    %55 = vector.broadcast %c12_i32 : i32 to vector<16x128xi32>
    %56 = arith.cmpi slt, %8, %55 : vector<16x128xi32>
    %57 = arith.andi %10, %56 : vector<16x128xi1>
    %c4_i32_13 = arith.constant 4 : i32
    %58 = tpu.dynamic_rotate %49 by %c4_i32_13 dim 0 : vector<16x128xf32>, i32 -> vector<16x128xf32>
    %c4_i32_14 = arith.constant 4 : i32
    %59 = tpu.dynamic_rotate %51 by %c4_i32_14 dim 0 : vector<16x128xf32>, i32 -> vector<16x128xf32>
    %c12_i32_15 = arith.constant 12 : i32
    %60 = tpu.dynamic_rotate %49 by %c12_i32_15 dim 0 : vector<16x128xf32>, i32 -> vector<16x128xf32>
    %c12_i32_16 = arith.constant 12 : i32
    %61 = tpu.dynamic_rotate %51 by %c12_i32_16 dim 0 : vector<16x128xf32>, i32 -> vector<16x128xf32>
    %62 = arith.cmpf oge, %58, %49 : vector<16x128xf32>
    %63 = arith.andi %54, %62 : vector<16x128xi1>
    %64 = arith.cmpf oge, %60, %49 : vector<16x128xf32>
    %65 = arith.andi %57, %64 : vector<16x128xi1>
    %66 = arith.select %65, %60, %49 : vector<16x128xi1>, vector<16x128xf32>
    %67 = arith.select %63, %58, %66 : vector<16x128xi1>, vector<16x128xf32>
    %68 = arith.select %65, %61, %51 : vector<16x128xi1>, vector<16x128xf32>
    %69 = arith.select %63, %59, %68 : vector<16x128xi1>, vector<16x128xf32>
    %c8_i32 = arith.constant 8 : i32
    %70 = vector.broadcast %c8_i32 : i32 to vector<16x128xi32>
    %71 = arith.cmpi sge, %8, %70 : vector<16x128xi32>
    %72 = arith.andi %15, %71 : vector<16x128xi1>
    %c8_i32_17 = arith.constant 8 : i32
    %73 = vector.broadcast %c8_i32_17 : i32 to vector<16x128xi32>
    %74 = arith.cmpi slt, %8, %73 : vector<16x128xi32>
    %75 = arith.andi %10, %74 : vector<16x128xi1>
    %c8_i32_18 = arith.constant 8 : i32
    %76 = tpu.dynamic_rotate %67 by %c8_i32_18 dim 0 : vector<16x128xf32>, i32 -> vector<16x128xf32>
    %c8_i32_19 = arith.constant 8 : i32
    %77 = tpu.dynamic_rotate %69 by %c8_i32_19 dim 0 : vector<16x128xf32>, i32 -> vector<16x128xf32>
    %78 = arith.ori %72, %75 : vector<16x128xi1>
    %79 = arith.cmpf oge, %76, %67 : vector<16x128xf32>
    %80 = arith.andi %78, %79 : vector<16x128xi1>
    %81 = arith.select %80, %76, %67 : vector<16x128xi1>, vector<16x128xf32>
    %82 = arith.select %80, %77, %69 : vector<16x128xi1>, vector<16x128xf32>
    %cst_20 = arith.constant dense<true> : vector<16x128xi1>
    %83 = arith.xori %14, %cst_20 : vector<16x128xi1>
    %c1_i32_21 = arith.constant 1 : i32
    %84 = vector.broadcast %c1_i32_21 : i32 to vector<16x128xi32>
    %85 = arith.cmpi sge, %6, %84 : vector<16x128xi32>
    %86 = arith.andi %83, %85 : vector<16x128xi1>
    %c15_i32_22 = arith.constant 15 : i32
    %87 = vector.broadcast %c15_i32_22 : i32 to vector<16x128xi32>
    %88 = arith.cmpi slt, %6, %87 : vector<16x128xi32>
    %89 = arith.andi %14, %88 : vector<16x128xi1>
    %c8_i32_23 = arith.constant 8 : i32
    %90 = tpu.dynamic_rotate %81 by %c8_i32_23 dim 1 : vector<16x128xf32>, i32 -> vector<16x128xf32>
    %c8_i32_24 = arith.constant 8 : i32
    %91 = tpu.dynamic_rotate %82 by %c8_i32_24 dim 1 : vector<16x128xf32>, i32 -> vector<16x128xf32>
    %c120_i32 = arith.constant 120 : i32
    %92 = tpu.dynamic_rotate %81 by %c120_i32 dim 1 : vector<16x128xf32>, i32 -> vector<16x128xf32>
    %c120_i32_25 = arith.constant 120 : i32
    %93 = tpu.dynamic_rotate %82 by %c120_i32_25 dim 1 : vector<16x128xf32>, i32 -> vector<16x128xf32>
    %94 = arith.cmpf oge, %90, %81 : vector<16x128xf32>
    %95 = arith.andi %86, %94 : vector<16x128xi1>
    %96 = arith.cmpf oge, %92, %81 : vector<16x128xf32>
    %97 = arith.andi %89, %96 : vector<16x128xi1>
    %98 = arith.select %97, %92, %81 : vector<16x128xi1>, vector<16x128xf32>
    %99 = arith.select %95, %90, %98 : vector<16x128xi1>, vector<16x128xf32>
    %100 = arith.select %97, %93, %82 : vector<16x128xi1>, vector<16x128xf32>
    %101 = arith.select %95, %91, %100 : vector<16x128xi1>, vector<16x128xf32>
    %c2_i32_26 = arith.constant 2 : i32
    %102 = vector.broadcast %c2_i32_26 : i32 to vector<16x128xi32>
    %103 = arith.cmpi sge, %6, %102 : vector<16x128xi32>
    %104 = arith.andi %83, %103 : vector<16x128xi1>
    %c14_i32_27 = arith.constant 14 : i32
    %105 = vector.broadcast %c14_i32_27 : i32 to vector<16x128xi32>
    %106 = arith.cmpi slt, %6, %105 : vector<16x128xi32>
    %107 = arith.andi %14, %106 : vector<16x128xi1>
    %c16_i32 = arith.constant 16 : i32
    %108 = tpu.dynamic_rotate %99 by %c16_i32 dim 1 : vector<16x128xf32>, i32 -> vector<16x128xf32>
    %c16_i32_28 = arith.constant 16 : i32
    %109 = tpu.dynamic_rotate %101 by %c16_i32_28 dim 1 : vector<16x128xf32>, i32 -> vector<16x128xf32>
    %c112_i32 = arith.constant 112 : i32
    %110 = tpu.dynamic_rotate %99 by %c112_i32 dim 1 : vector<16x128xf32>, i32 -> vector<16x128xf32>
    %c112_i32_29 = arith.constant 112 : i32
    %111 = tpu.dynamic_rotate %101 by %c112_i32_29 dim 1 : vector<16x128xf32>, i32 -> vector<16x128xf32>
    %112 = arith.cmpf oge, %108, %99 : vector<16x128xf32>
    %113 = arith.andi %104, %112 : vector<16x128xi1>
    %114 = arith.cmpf oge, %110, %99 : vector<16x128xf32>
    %115 = arith.andi %107, %114 : vector<16x128xi1>
    %116 = arith.select %115, %110, %99 : vector<16x128xi1>, vector<16x128xf32>
    %117 = arith.select %113, %108, %116 : vector<16x128xi1>, vector<16x128xf32>
    %118 = arith.select %115, %111, %101 : vector<16x128xi1>, vector<16x128xf32>
    %119 = arith.select %113, %109, %118 : vector<16x128xi1>, vector<16x128xf32>
    %c4_i32_30 = arith.constant 4 : i32
    %120 = vector.broadcast %c4_i32_30 : i32 to vector<16x128xi32>
    %121 = arith.cmpi sge, %6, %120 : vector<16x128xi32>
    %122 = arith.andi %83, %121 : vector<16x128xi1>
    %c12_i32_31 = arith.constant 12 : i32
    %123 = vector.broadcast %c12_i32_31 : i32 to vector<16x128xi32>
    %124 = arith.cmpi slt, %6, %123 : vector<16x128xi32>
    %125 = arith.andi %14, %124 : vector<16x128xi1>
    %c32_i32 = arith.constant 32 : i32
    %126 = tpu.dynamic_rotate %117 by %c32_i32 dim 1 : vector<16x128xf32>, i32 -> vector<16x128xf32>
    %c32_i32_32 = arith.constant 32 : i32
    %127 = tpu.dynamic_rotate %119 by %c32_i32_32 dim 1 : vector<16x128xf32>, i32 -> vector<16x128xf32>
    %c96_i32 = arith.constant 96 : i32
    %128 = tpu.dynamic_rotate %117 by %c96_i32 dim 1 : vector<16x128xf32>, i32 -> vector<16x128xf32>
    %c96_i32_33 = arith.constant 96 : i32
    %129 = tpu.dynamic_rotate %119 by %c96_i32_33 dim 1 : vector<16x128xf32>, i32 -> vector<16x128xf32>
    %130 = arith.cmpf oge, %126, %117 : vector<16x128xf32>
    %131 = arith.andi %122, %130 : vector<16x128xi1>
    %132 = arith.cmpf oge, %128, %117 : vector<16x128xf32>
    %133 = arith.andi %125, %132 : vector<16x128xi1>
    %134 = arith.select %133, %128, %117 : vector<16x128xi1>, vector<16x128xf32>
    %135 = arith.select %131, %126, %134 : vector<16x128xi1>, vector<16x128xf32>
    %136 = arith.select %133, %129, %119 : vector<16x128xi1>, vector<16x128xf32>
    %137 = arith.select %131, %127, %136 : vector<16x128xi1>, vector<16x128xf32>
    %c8_i32_34 = arith.constant 8 : i32
    %138 = vector.broadcast %c8_i32_34 : i32 to vector<16x128xi32>
    %139 = arith.cmpi sge, %6, %138 : vector<16x128xi32>
    %140 = arith.andi %83, %139 : vector<16x128xi1>
    %c8_i32_35 = arith.constant 8 : i32
    %141 = vector.broadcast %c8_i32_35 : i32 to vector<16x128xi32>
    %142 = arith.cmpi slt, %6, %141 : vector<16x128xi32>
    %143 = arith.andi %14, %142 : vector<16x128xi1>
    %c64_i32 = arith.constant 64 : i32
    %144 = tpu.dynamic_rotate %135 by %c64_i32 dim 1 : vector<16x128xf32>, i32 -> vector<16x128xf32>
    %c64_i32_36 = arith.constant 64 : i32
    %145 = tpu.dynamic_rotate %137 by %c64_i32_36 dim 1 : vector<16x128xf32>, i32 -> vector<16x128xf32>
    %146 = arith.ori %140, %143 : vector<16x128xi1>
    %147 = arith.cmpf oge, %144, %135 : vector<16x128xf32>
    %148 = arith.andi %146, %147 : vector<16x128xi1>
    %149 = arith.select %148, %145, %137 : vector<16x128xi1>, vector<16x128xf32>
    %c1_i32_37 = arith.constant 1 : i32
    %150 = tpu.dynamic_rotate %149 by %c1_i32_37 dim 0 : vector<16x128xf32>, i32 -> vector<16x128xf32>
    %c8_i32_38 = arith.constant 8 : i32
    %151 = tpu.dynamic_rotate %150 by %c8_i32_38 dim 1 : vector<16x128xf32>, i32 -> vector<16x128xf32>
    %c1_i32_39 = arith.constant 1 : i32
    %152 = vector.broadcast %c1_i32_39 : i32 to vector<16x128xi32>
    %153 = arith.cmpi sge, %8, %152 : vector<16x128xi32>
    %c1_i32_40 = arith.constant 1 : i32
    %154 = vector.broadcast %c1_i32_40 : i32 to vector<16x128xi32>
    %155 = arith.cmpi sge, %6, %154 : vector<16x128xi32>
    %156 = arith.andi %153, %155 : vector<16x128xi1>
    %cst_41 = arith.constant 0.000000e+00 : f32
    %157 = vector.broadcast %cst_41 : f32 to vector<16x128xf32>
    %158 = arith.select %156, %151, %157 : vector<16x128xi1>, vector<16x128xf32>
    %c1_i32_42 = arith.constant 1 : i32
    %159 = tpu.dynamic_rotate %149 by %c1_i32_42 dim 0 : vector<16x128xf32>, i32 -> vector<16x128xf32>
    %c1_i32_43 = arith.constant 1 : i32
    %160 = vector.broadcast %c1_i32_43 : i32 to vector<16x128xi32>
    %161 = arith.cmpi sge, %8, %160 : vector<16x128xi32>
    %cst_44 = arith.constant 0.000000e+00 : f32
    %162 = vector.broadcast %cst_44 : f32 to vector<16x128xf32>
    %163 = arith.select %161, %159, %162 : vector<16x128xi1>, vector<16x128xf32>
    %c1_i32_45 = arith.constant 1 : i32
    %164 = tpu.dynamic_rotate %149 by %c1_i32_45 dim 0 : vector<16x128xf32>, i32 -> vector<16x128xf32>
    %c120_i32_46 = arith.constant 120 : i32
    %165 = tpu.dynamic_rotate %164 by %c120_i32_46 dim 1 : vector<16x128xf32>, i32 -> vector<16x128xf32>
    %c1_i32_47 = arith.constant 1 : i32
    %166 = vector.broadcast %c1_i32_47 : i32 to vector<16x128xi32>
    %167 = arith.cmpi sge, %8, %166 : vector<16x128xi32>
    %c15_i32_48 = arith.constant 15 : i32
    %168 = vector.broadcast %c15_i32_48 : i32 to vector<16x128xi32>
    %169 = arith.cmpi slt, %6, %168 : vector<16x128xi32>
    %170 = arith.andi %167, %169 : vector<16x128xi1>
    %cst_49 = arith.constant 0.000000e+00 : f32
    %171 = vector.broadcast %cst_49 : f32 to vector<16x128xf32>
    %172 = arith.select %170, %165, %171 : vector<16x128xi1>, vector<16x128xf32>
    %c8_i32_50 = arith.constant 8 : i32
    %173 = tpu.dynamic_rotate %149 by %c8_i32_50 dim 1 : vector<16x128xf32>, i32 -> vector<16x128xf32>
    %c1_i32_51 = arith.constant 1 : i32
    %174 = vector.broadcast %c1_i32_51 : i32 to vector<16x128xi32>
    %175 = arith.cmpi sge, %6, %174 : vector<16x128xi32>
    %cst_52 = arith.constant 0.000000e+00 : f32
    %176 = vector.broadcast %cst_52 : f32 to vector<16x128xf32>
    %177 = arith.select %175, %173, %176 : vector<16x128xi1>, vector<16x128xf32>
    %c120_i32_53 = arith.constant 120 : i32
    %178 = tpu.dynamic_rotate %149 by %c120_i32_53 dim 1 : vector<16x128xf32>, i32 -> vector<16x128xf32>
    %c15_i32_54 = arith.constant 15 : i32
    %179 = vector.broadcast %c15_i32_54 : i32 to vector<16x128xi32>
    %180 = arith.cmpi slt, %6, %179 : vector<16x128xi32>
    %cst_55 = arith.constant 0.000000e+00 : f32
    %181 = vector.broadcast %cst_55 : f32 to vector<16x128xf32>
    %182 = arith.select %180, %178, %181 : vector<16x128xi1>, vector<16x128xf32>
    %c15_i32_56 = arith.constant 15 : i32
    %183 = tpu.dynamic_rotate %149 by %c15_i32_56 dim 0 : vector<16x128xf32>, i32 -> vector<16x128xf32>
    %c8_i32_57 = arith.constant 8 : i32
    %184 = tpu.dynamic_rotate %183 by %c8_i32_57 dim 1 : vector<16x128xf32>, i32 -> vector<16x128xf32>
    %c15_i32_58 = arith.constant 15 : i32
    %185 = vector.broadcast %c15_i32_58 : i32 to vector<16x128xi32>
    %186 = arith.cmpi slt, %8, %185 : vector<16x128xi32>
    %c1_i32_59 = arith.constant 1 : i32
    %187 = vector.broadcast %c1_i32_59 : i32 to vector<16x128xi32>
    %188 = arith.cmpi sge, %6, %187 : vector<16x128xi32>
    %189 = arith.andi %186, %188 : vector<16x128xi1>
    %cst_60 = arith.constant 0.000000e+00 : f32
    %190 = vector.broadcast %cst_60 : f32 to vector<16x128xf32>
    %191 = arith.select %189, %184, %190 : vector<16x128xi1>, vector<16x128xf32>
    %c15_i32_61 = arith.constant 15 : i32
    %192 = tpu.dynamic_rotate %149 by %c15_i32_61 dim 0 : vector<16x128xf32>, i32 -> vector<16x128xf32>
    %c15_i32_62 = arith.constant 15 : i32
    %193 = vector.broadcast %c15_i32_62 : i32 to vector<16x128xi32>
    %194 = arith.cmpi slt, %8, %193 : vector<16x128xi32>
    %cst_63 = arith.constant 0.000000e+00 : f32
    %195 = vector.broadcast %cst_63 : f32 to vector<16x128xf32>
    %196 = arith.select %194, %192, %195 : vector<16x128xi1>, vector<16x128xf32>
    %c15_i32_64 = arith.constant 15 : i32
    %197 = tpu.dynamic_rotate %149 by %c15_i32_64 dim 0 : vector<16x128xf32>, i32 -> vector<16x128xf32>
    %c120_i32_65 = arith.constant 120 : i32
    %198 = tpu.dynamic_rotate %197 by %c120_i32_65 dim 1 : vector<16x128xf32>, i32 -> vector<16x128xf32>
    %c15_i32_66 = arith.constant 15 : i32
    %199 = vector.broadcast %c15_i32_66 : i32 to vector<16x128xi32>
    %200 = arith.cmpi slt, %8, %199 : vector<16x128xi32>
    %c15_i32_67 = arith.constant 15 : i32
    %201 = vector.broadcast %c15_i32_67 : i32 to vector<16x128xi32>
    %202 = arith.cmpi slt, %6, %201 : vector<16x128xi32>
    %203 = arith.andi %200, %202 : vector<16x128xi1>
    %cst_68 = arith.constant 0.000000e+00 : f32
    %204 = vector.broadcast %cst_68 : f32 to vector<16x128xf32>
    %205 = arith.select %203, %198, %204 : vector<16x128xi1>, vector<16x128xf32>
    %206 = tpu.concatenate %158, %163, %172, %177, %149, %182, %191, %196, %205 in 1 : vector<16x128xf32>, vector<16x128xf32>, vector<16x128xf32>, vector<16x128xf32>, vector<16x128xf32>, vector<16x128xf32>, vector<16x128xf32>, vector<16x128xf32>, vector<16x128xf32> -> vector<16x1152xf32>
    %c0_69 = arith.constant 0 : index
    %c0_70 = arith.constant 0 : index
    %207 = vector.load %arg2[%c0_69, %c0_70] : memref<1152x128xf32, #tpu.memory_space<vmem>>, vector<1152x128xf32>
    %cst_71 = arith.constant dense<0.000000e+00> : vector<16x128xf32>
    %208 = tpu.matmul %206, %207, %cst_71 {dimension_numbers = #tpu.dot_dimension_numbers<[1], [0], [0], [1], [0, 0, 1, 1], [], []>} : vector<16x1152xf32>, vector<1152x128xf32>, vector<16x128xf32> -> vector<16x128xf32>
    %c0_72 = arith.constant 0 : index
    %c0_73 = arith.constant 0 : index
    %209 = vector.load %arg3[%c0_72, %c0_73] : memref<1x128xf32, #tpu.memory_space<vmem>>, vector<1x128xf32>
    %210 = vector.broadcast %209 : vector<1x128xf32> to vector<16x128xf32>
    %211 = arith.addf %208, %210 : vector<16x128xf32>
    %cst_74 = arith.constant dense<true> : vector<16x128xi1>
    %212 = arith.xori %10, %cst_74 : vector<16x128xi1>
    %c1_i32_75 = arith.constant 1 : i32
    %213 = vector.broadcast %c1_i32_75 : i32 to vector<16x128xi32>
    %214 = arith.cmpi sge, %8, %213 : vector<16x128xi32>
    %215 = arith.andi %212, %214 : vector<16x128xi1>
    %c15_i32_76 = arith.constant 15 : i32
    %216 = vector.broadcast %c15_i32_76 : i32 to vector<16x128xi32>
    %217 = arith.cmpi slt, %8, %216 : vector<16x128xi32>
    %218 = arith.andi %10, %217 : vector<16x128xi1>
    %c1_i32_77 = arith.constant 1 : i32
    %219 = tpu.dynamic_rotate %0 by %c1_i32_77 dim 0 : vector<16x128xf32>, i32 -> vector<16x128xf32>
    %c1_i32_78 = arith.constant 1 : i32
    %220 = tpu.dynamic_rotate %211 by %c1_i32_78 dim 0 : vector<16x128xf32>, i32 -> vector<16x128xf32>
    %c15_i32_79 = arith.constant 15 : i32
    %221 = tpu.dynamic_rotate %0 by %c15_i32_79 dim 0 : vector<16x128xf32>, i32 -> vector<16x128xf32>
    %c15_i32_80 = arith.constant 15 : i32
    %222 = tpu.dynamic_rotate %211 by %c15_i32_80 dim 0 : vector<16x128xf32>, i32 -> vector<16x128xf32>
    %223 = arith.cmpf oge, %219, %0 : vector<16x128xf32>
    %224 = arith.andi %215, %223 : vector<16x128xi1>
    %225 = arith.cmpf oge, %221, %0 : vector<16x128xf32>
    %226 = arith.andi %218, %225 : vector<16x128xi1>
    %227 = arith.select %226, %221, %0 : vector<16x128xi1>, vector<16x128xf32>
    %228 = arith.select %224, %219, %227 : vector<16x128xi1>, vector<16x128xf32>
    %229 = arith.select %226, %222, %211 : vector<16x128xi1>, vector<16x128xf32>
    %230 = arith.select %224, %220, %229 : vector<16x128xi1>, vector<16x128xf32>
    %c2_i32_81 = arith.constant 2 : i32
    %231 = vector.broadcast %c2_i32_81 : i32 to vector<16x128xi32>
    %232 = arith.cmpi sge, %8, %231 : vector<16x128xi32>
    %233 = arith.andi %212, %232 : vector<16x128xi1>
    %c14_i32_82 = arith.constant 14 : i32
    %234 = vector.broadcast %c14_i32_82 : i32 to vector<16x128xi32>
    %235 = arith.cmpi slt, %8, %234 : vector<16x128xi32>
    %236 = arith.andi %10, %235 : vector<16x128xi1>
    %c2_i32_83 = arith.constant 2 : i32
    %237 = tpu.dynamic_rotate %228 by %c2_i32_83 dim 0 : vector<16x128xf32>, i32 -> vector<16x128xf32>
    %c2_i32_84 = arith.constant 2 : i32
    %238 = tpu.dynamic_rotate %230 by %c2_i32_84 dim 0 : vector<16x128xf32>, i32 -> vector<16x128xf32>
    %c14_i32_85 = arith.constant 14 : i32
    %239 = tpu.dynamic_rotate %228 by %c14_i32_85 dim 0 : vector<16x128xf32>, i32 -> vector<16x128xf32>
    %c14_i32_86 = arith.constant 14 : i32
    %240 = tpu.dynamic_rotate %230 by %c14_i32_86 dim 0 : vector<16x128xf32>, i32 -> vector<16x128xf32>
    %241 = arith.cmpf oge, %237, %228 : vector<16x128xf32>
    %242 = arith.andi %233, %241 : vector<16x128xi1>
    %243 = arith.cmpf oge, %239, %228 : vector<16x128xf32>
    %244 = arith.andi %236, %243 : vector<16x128xi1>
    %245 = arith.select %244, %239, %228 : vector<16x128xi1>, vector<16x128xf32>
    %246 = arith.select %242, %237, %245 : vector<16x128xi1>, vector<16x128xf32>
    %247 = arith.select %244, %240, %230 : vector<16x128xi1>, vector<16x128xf32>
    %248 = arith.select %242, %238, %247 : vector<16x128xi1>, vector<16x128xf32>
    %c4_i32_87 = arith.constant 4 : i32
    %249 = vector.broadcast %c4_i32_87 : i32 to vector<16x128xi32>
    %250 = arith.cmpi sge, %8, %249 : vector<16x128xi32>
    %251 = arith.andi %212, %250 : vector<16x128xi1>
    %c12_i32_88 = arith.constant 12 : i32
    %252 = vector.broadcast %c12_i32_88 : i32 to vector<16x128xi32>
    %253 = arith.cmpi slt, %8, %252 : vector<16x128xi32>
    %254 = arith.andi %10, %253 : vector<16x128xi1>
    %c4_i32_89 = arith.constant 4 : i32
    %255 = tpu.dynamic_rotate %246 by %c4_i32_89 dim 0 : vector<16x128xf32>, i32 -> vector<16x128xf32>
    %c4_i32_90 = arith.constant 4 : i32
    %256 = tpu.dynamic_rotate %248 by %c4_i32_90 dim 0 : vector<16x128xf32>, i32 -> vector<16x128xf32>
    %c12_i32_91 = arith.constant 12 : i32
    %257 = tpu.dynamic_rotate %246 by %c12_i32_91 dim 0 : vector<16x128xf32>, i32 -> vector<16x128xf32>
    %c12_i32_92 = arith.constant 12 : i32
    %258 = tpu.dynamic_rotate %248 by %c12_i32_92 dim 0 : vector<16x128xf32>, i32 -> vector<16x128xf32>
    %259 = arith.cmpf oge, %255, %246 : vector<16x128xf32>
    %260 = arith.andi %251, %259 : vector<16x128xi1>
    %261 = arith.cmpf oge, %257, %246 : vector<16x128xf32>
    %262 = arith.andi %254, %261 : vector<16x128xi1>
    %263 = arith.select %262, %257, %246 : vector<16x128xi1>, vector<16x128xf32>
    %264 = arith.select %260, %255, %263 : vector<16x128xi1>, vector<16x128xf32>
    %265 = arith.select %262, %258, %248 : vector<16x128xi1>, vector<16x128xf32>
    %266 = arith.select %260, %256, %265 : vector<16x128xi1>, vector<16x128xf32>
    %c8_i32_93 = arith.constant 8 : i32
    %267 = vector.broadcast %c8_i32_93 : i32 to vector<16x128xi32>
    %268 = arith.cmpi sge, %8, %267 : vector<16x128xi32>
    %269 = arith.andi %212, %268 : vector<16x128xi1>
    %c8_i32_94 = arith.constant 8 : i32
    %270 = vector.broadcast %c8_i32_94 : i32 to vector<16x128xi32>
    %271 = arith.cmpi slt, %8, %270 : vector<16x128xi32>
    %272 = arith.andi %10, %271 : vector<16x128xi1>
    %c8_i32_95 = arith.constant 8 : i32
    %273 = tpu.dynamic_rotate %264 by %c8_i32_95 dim 0 : vector<16x128xf32>, i32 -> vector<16x128xf32>
    %c8_i32_96 = arith.constant 8 : i32
    %274 = tpu.dynamic_rotate %266 by %c8_i32_96 dim 0 : vector<16x128xf32>, i32 -> vector<16x128xf32>
    %275 = arith.ori %269, %272 : vector<16x128xi1>
    %276 = arith.cmpf oge, %273, %264 : vector<16x128xf32>
    %277 = arith.andi %275, %276 : vector<16x128xi1>
    %278 = arith.select %277, %273, %264 : vector<16x128xi1>, vector<16x128xf32>
    %279 = arith.select %277, %274, %266 : vector<16x128xi1>, vector<16x128xf32>
    %cst_97 = arith.constant dense<true> : vector<16x128xi1>
    %280 = arith.xori %14, %cst_97 : vector<16x128xi1>
    %c1_i32_98 = arith.constant 1 : i32
    %281 = vector.broadcast %c1_i32_98 : i32 to vector<16x128xi32>
    %282 = arith.cmpi sge, %6, %281 : vector<16x128xi32>
    %283 = arith.andi %280, %282 : vector<16x128xi1>
    %c15_i32_99 = arith.constant 15 : i32
    %284 = vector.broadcast %c15_i32_99 : i32 to vector<16x128xi32>
    %285 = arith.cmpi slt, %6, %284 : vector<16x128xi32>
    %286 = arith.andi %14, %285 : vector<16x128xi1>
    %c8_i32_100 = arith.constant 8 : i32
    %287 = tpu.dynamic_rotate %278 by %c8_i32_100 dim 1 : vector<16x128xf32>, i32 -> vector<16x128xf32>
    %c8_i32_101 = arith.constant 8 : i32
    %288 = tpu.dynamic_rotate %279 by %c8_i32_101 dim 1 : vector<16x128xf32>, i32 -> vector<16x128xf32>
    %c120_i32_102 = arith.constant 120 : i32
    %289 = tpu.dynamic_rotate %278 by %c120_i32_102 dim 1 : vector<16x128xf32>, i32 -> vector<16x128xf32>
    %c120_i32_103 = arith.constant 120 : i32
    %290 = tpu.dynamic_rotate %279 by %c120_i32_103 dim 1 : vector<16x128xf32>, i32 -> vector<16x128xf32>
    %291 = arith.cmpf oge, %287, %278 : vector<16x128xf32>
    %292 = arith.andi %283, %291 : vector<16x128xi1>
    %293 = arith.cmpf oge, %289, %278 : vector<16x128xf32>
    %294 = arith.andi %286, %293 : vector<16x128xi1>
    %295 = arith.select %294, %289, %278 : vector<16x128xi1>, vector<16x128xf32>
    %296 = arith.select %292, %287, %295 : vector<16x128xi1>, vector<16x128xf32>
    %297 = arith.select %294, %290, %279 : vector<16x128xi1>, vector<16x128xf32>
    %298 = arith.select %292, %288, %297 : vector<16x128xi1>, vector<16x128xf32>
    %c2_i32_104 = arith.constant 2 : i32
    %299 = vector.broadcast %c2_i32_104 : i32 to vector<16x128xi32>
    %300 = arith.cmpi sge, %6, %299 : vector<16x128xi32>
    %301 = arith.andi %280, %300 : vector<16x128xi1>
    %c14_i32_105 = arith.constant 14 : i32
    %302 = vector.broadcast %c14_i32_105 : i32 to vector<16x128xi32>
    %303 = arith.cmpi slt, %6, %302 : vector<16x128xi32>
    %304 = arith.andi %14, %303 : vector<16x128xi1>
    %c16_i32_106 = arith.constant 16 : i32
    %305 = tpu.dynamic_rotate %296 by %c16_i32_106 dim 1 : vector<16x128xf32>, i32 -> vector<16x128xf32>
    %c16_i32_107 = arith.constant 16 : i32
    %306 = tpu.dynamic_rotate %298 by %c16_i32_107 dim 1 : vector<16x128xf32>, i32 -> vector<16x128xf32>
    %c112_i32_108 = arith.constant 112 : i32
    %307 = tpu.dynamic_rotate %296 by %c112_i32_108 dim 1 : vector<16x128xf32>, i32 -> vector<16x128xf32>
    %c112_i32_109 = arith.constant 112 : i32
    %308 = tpu.dynamic_rotate %298 by %c112_i32_109 dim 1 : vector<16x128xf32>, i32 -> vector<16x128xf32>
    %309 = arith.cmpf oge, %305, %296 : vector<16x128xf32>
    %310 = arith.andi %301, %309 : vector<16x128xi1>
    %311 = arith.cmpf oge, %307, %296 : vector<16x128xf32>
    %312 = arith.andi %304, %311 : vector<16x128xi1>
    %313 = arith.select %312, %307, %296 : vector<16x128xi1>, vector<16x128xf32>
    %314 = arith.select %310, %305, %313 : vector<16x128xi1>, vector<16x128xf32>
    %315 = arith.select %312, %308, %298 : vector<16x128xi1>, vector<16x128xf32>
    %316 = arith.select %310, %306, %315 : vector<16x128xi1>, vector<16x128xf32>
    %c4_i32_110 = arith.constant 4 : i32
    %317 = vector.broadcast %c4_i32_110 : i32 to vector<16x128xi32>
    %318 = arith.cmpi sge, %6, %317 : vector<16x128xi32>
    %319 = arith.andi %280, %318 : vector<16x128xi1>
    %c12_i32_111 = arith.constant 12 : i32
    %320 = vector.broadcast %c12_i32_111 : i32 to vector<16x128xi32>
    %321 = arith.cmpi slt, %6, %320 : vector<16x128xi32>
    %322 = arith.andi %14, %321 : vector<16x128xi1>
    %c32_i32_112 = arith.constant 32 : i32
    %323 = tpu.dynamic_rotate %314 by %c32_i32_112 dim 1 : vector<16x128xf32>, i32 -> vector<16x128xf32>
    %c32_i32_113 = arith.constant 32 : i32
    %324 = tpu.dynamic_rotate %316 by %c32_i32_113 dim 1 : vector<16x128xf32>, i32 -> vector<16x128xf32>
    %c96_i32_114 = arith.constant 96 : i32
    %325 = tpu.dynamic_rotate %314 by %c96_i32_114 dim 1 : vector<16x128xf32>, i32 -> vector<16x128xf32>
    %c96_i32_115 = arith.constant 96 : i32
    %326 = tpu.dynamic_rotate %316 by %c96_i32_115 dim 1 : vector<16x128xf32>, i32 -> vector<16x128xf32>
    %327 = arith.cmpf oge, %323, %314 : vector<16x128xf32>
    %328 = arith.andi %319, %327 : vector<16x128xi1>
    %329 = arith.cmpf oge, %325, %314 : vector<16x128xf32>
    %330 = arith.andi %322, %329 : vector<16x128xi1>
    %331 = arith.select %330, %325, %314 : vector<16x128xi1>, vector<16x128xf32>
    %332 = arith.select %328, %323, %331 : vector<16x128xi1>, vector<16x128xf32>
    %333 = arith.select %330, %326, %316 : vector<16x128xi1>, vector<16x128xf32>
    %334 = arith.select %328, %324, %333 : vector<16x128xi1>, vector<16x128xf32>
    %c8_i32_116 = arith.constant 8 : i32
    %335 = vector.broadcast %c8_i32_116 : i32 to vector<16x128xi32>
    %336 = arith.cmpi sge, %6, %335 : vector<16x128xi32>
    %337 = arith.andi %280, %336 : vector<16x128xi1>
    %c8_i32_117 = arith.constant 8 : i32
    %338 = vector.broadcast %c8_i32_117 : i32 to vector<16x128xi32>
    %339 = arith.cmpi slt, %6, %338 : vector<16x128xi32>
    %340 = arith.andi %14, %339 : vector<16x128xi1>
    %c64_i32_118 = arith.constant 64 : i32
    %341 = tpu.dynamic_rotate %332 by %c64_i32_118 dim 1 : vector<16x128xf32>, i32 -> vector<16x128xf32>
    %c64_i32_119 = arith.constant 64 : i32
    %342 = tpu.dynamic_rotate %334 by %c64_i32_119 dim 1 : vector<16x128xf32>, i32 -> vector<16x128xf32>
    %343 = arith.ori %337, %340 : vector<16x128xi1>
    %344 = arith.cmpf oge, %341, %332 : vector<16x128xf32>
    %345 = arith.andi %343, %344 : vector<16x128xi1>
    %346 = arith.select %345, %342, %334 : vector<16x128xi1>, vector<16x128xf32>
    %c1_i32_120 = arith.constant 1 : i32
    %347 = tpu.dynamic_rotate %346 by %c1_i32_120 dim 0 : vector<16x128xf32>, i32 -> vector<16x128xf32>
    %c8_i32_121 = arith.constant 8 : i32
    %348 = tpu.dynamic_rotate %347 by %c8_i32_121 dim 1 : vector<16x128xf32>, i32 -> vector<16x128xf32>
    %c1_i32_122 = arith.constant 1 : i32
    %349 = vector.broadcast %c1_i32_122 : i32 to vector<16x128xi32>
    %350 = arith.cmpi sge, %8, %349 : vector<16x128xi32>
    %c1_i32_123 = arith.constant 1 : i32
    %351 = vector.broadcast %c1_i32_123 : i32 to vector<16x128xi32>
    %352 = arith.cmpi sge, %6, %351 : vector<16x128xi32>
    %353 = arith.andi %350, %352 : vector<16x128xi1>
    %cst_124 = arith.constant 0.000000e+00 : f32
    %354 = vector.broadcast %cst_124 : f32 to vector<16x128xf32>
    %355 = arith.select %353, %348, %354 : vector<16x128xi1>, vector<16x128xf32>
    %c1_i32_125 = arith.constant 1 : i32
    %356 = tpu.dynamic_rotate %346 by %c1_i32_125 dim 0 : vector<16x128xf32>, i32 -> vector<16x128xf32>
    %c1_i32_126 = arith.constant 1 : i32
    %357 = vector.broadcast %c1_i32_126 : i32 to vector<16x128xi32>
    %358 = arith.cmpi sge, %8, %357 : vector<16x128xi32>
    %cst_127 = arith.constant 0.000000e+00 : f32
    %359 = vector.broadcast %cst_127 : f32 to vector<16x128xf32>
    %360 = arith.select %358, %356, %359 : vector<16x128xi1>, vector<16x128xf32>
    %c1_i32_128 = arith.constant 1 : i32
    %361 = tpu.dynamic_rotate %346 by %c1_i32_128 dim 0 : vector<16x128xf32>, i32 -> vector<16x128xf32>
    %c120_i32_129 = arith.constant 120 : i32
    %362 = tpu.dynamic_rotate %361 by %c120_i32_129 dim 1 : vector<16x128xf32>, i32 -> vector<16x128xf32>
    %c1_i32_130 = arith.constant 1 : i32
    %363 = vector.broadcast %c1_i32_130 : i32 to vector<16x128xi32>
    %364 = arith.cmpi sge, %8, %363 : vector<16x128xi32>
    %c15_i32_131 = arith.constant 15 : i32
    %365 = vector.broadcast %c15_i32_131 : i32 to vector<16x128xi32>
    %366 = arith.cmpi slt, %6, %365 : vector<16x128xi32>
    %367 = arith.andi %364, %366 : vector<16x128xi1>
    %cst_132 = arith.constant 0.000000e+00 : f32
    %368 = vector.broadcast %cst_132 : f32 to vector<16x128xf32>
    %369 = arith.select %367, %362, %368 : vector<16x128xi1>, vector<16x128xf32>
    %c8_i32_133 = arith.constant 8 : i32
    %370 = tpu.dynamic_rotate %346 by %c8_i32_133 dim 1 : vector<16x128xf32>, i32 -> vector<16x128xf32>
    %c1_i32_134 = arith.constant 1 : i32
    %371 = vector.broadcast %c1_i32_134 : i32 to vector<16x128xi32>
    %372 = arith.cmpi sge, %6, %371 : vector<16x128xi32>
    %cst_135 = arith.constant 0.000000e+00 : f32
    %373 = vector.broadcast %cst_135 : f32 to vector<16x128xf32>
    %374 = arith.select %372, %370, %373 : vector<16x128xi1>, vector<16x128xf32>
    %c120_i32_136 = arith.constant 120 : i32
    %375 = tpu.dynamic_rotate %346 by %c120_i32_136 dim 1 : vector<16x128xf32>, i32 -> vector<16x128xf32>
    %c15_i32_137 = arith.constant 15 : i32
    %376 = vector.broadcast %c15_i32_137 : i32 to vector<16x128xi32>
    %377 = arith.cmpi slt, %6, %376 : vector<16x128xi32>
    %cst_138 = arith.constant 0.000000e+00 : f32
    %378 = vector.broadcast %cst_138 : f32 to vector<16x128xf32>
    %379 = arith.select %377, %375, %378 : vector<16x128xi1>, vector<16x128xf32>
    %c15_i32_139 = arith.constant 15 : i32
    %380 = tpu.dynamic_rotate %346 by %c15_i32_139 dim 0 : vector<16x128xf32>, i32 -> vector<16x128xf32>
    %c8_i32_140 = arith.constant 8 : i32
    %381 = tpu.dynamic_rotate %380 by %c8_i32_140 dim 1 : vector<16x128xf32>, i32 -> vector<16x128xf32>
    %c15_i32_141 = arith.constant 15 : i32
    %382 = vector.broadcast %c15_i32_141 : i32 to vector<16x128xi32>
    %383 = arith.cmpi slt, %8, %382 : vector<16x128xi32>
    %c1_i32_142 = arith.constant 1 : i32
    %384 = vector.broadcast %c1_i32_142 : i32 to vector<16x128xi32>
    %385 = arith.cmpi sge, %6, %384 : vector<16x128xi32>
    %386 = arith.andi %383, %385 : vector<16x128xi1>
    %cst_143 = arith.constant 0.000000e+00 : f32
    %387 = vector.broadcast %cst_143 : f32 to vector<16x128xf32>
    %388 = arith.select %386, %381, %387 : vector<16x128xi1>, vector<16x128xf32>
    %c15_i32_144 = arith.constant 15 : i32
    %389 = tpu.dynamic_rotate %346 by %c15_i32_144 dim 0 : vector<16x128xf32>, i32 -> vector<16x128xf32>
    %c15_i32_145 = arith.constant 15 : i32
    %390 = vector.broadcast %c15_i32_145 : i32 to vector<16x128xi32>
    %391 = arith.cmpi slt, %8, %390 : vector<16x128xi32>
    %cst_146 = arith.constant 0.000000e+00 : f32
    %392 = vector.broadcast %cst_146 : f32 to vector<16x128xf32>
    %393 = arith.select %391, %389, %392 : vector<16x128xi1>, vector<16x128xf32>
    %c15_i32_147 = arith.constant 15 : i32
    %394 = tpu.dynamic_rotate %346 by %c15_i32_147 dim 0 : vector<16x128xf32>, i32 -> vector<16x128xf32>
    %c120_i32_148 = arith.constant 120 : i32
    %395 = tpu.dynamic_rotate %394 by %c120_i32_148 dim 1 : vector<16x128xf32>, i32 -> vector<16x128xf32>
    %c15_i32_149 = arith.constant 15 : i32
    %396 = vector.broadcast %c15_i32_149 : i32 to vector<16x128xi32>
    %397 = arith.cmpi slt, %8, %396 : vector<16x128xi32>
    %c15_i32_150 = arith.constant 15 : i32
    %398 = vector.broadcast %c15_i32_150 : i32 to vector<16x128xi32>
    %399 = arith.cmpi slt, %6, %398 : vector<16x128xi32>
    %400 = arith.andi %397, %399 : vector<16x128xi1>
    %cst_151 = arith.constant 0.000000e+00 : f32
    %401 = vector.broadcast %cst_151 : f32 to vector<16x128xf32>
    %402 = arith.select %400, %395, %401 : vector<16x128xi1>, vector<16x128xf32>
    %403 = tpu.concatenate %355, %360, %369, %374, %346, %379, %388, %393, %402 in 1 : vector<16x128xf32>, vector<16x128xf32>, vector<16x128xf32>, vector<16x128xf32>, vector<16x128xf32>, vector<16x128xf32>, vector<16x128xf32>, vector<16x128xf32>, vector<16x128xf32> -> vector<16x1152xf32>
    %c0_152 = arith.constant 0 : index
    %c0_153 = arith.constant 0 : index
    %404 = vector.load %arg4[%c0_152, %c0_153] : memref<1152x128xf32, #tpu.memory_space<vmem>>, vector<1152x128xf32>
    %cst_154 = arith.constant dense<0.000000e+00> : vector<16x128xf32>
    %405 = tpu.matmul %403, %404, %cst_154 {dimension_numbers = #tpu.dot_dimension_numbers<[1], [0], [0], [1], [0, 0, 1, 1], [], []>} : vector<16x1152xf32>, vector<1152x128xf32>, vector<16x128xf32> -> vector<16x128xf32>
    %c0_155 = arith.constant 0 : index
    %c0_156 = arith.constant 0 : index
    %406 = vector.load %arg5[%c0_155, %c0_156] : memref<1x128xf32, #tpu.memory_space<vmem>>, vector<1x128xf32>
    %407 = vector.broadcast %406 : vector<1x128xf32> to vector<16x128xf32>
    %408 = arith.addf %405, %407 : vector<16x128xf32>
    %c0_157 = arith.constant 0 : index
    %c0_158 = arith.constant 0 : index
    %409 = vector.load %arg6[%c0_157, %c0_158] : memref<16x128xf32, #tpu.memory_space<vmem>>, vector<16x128xf32>
    tpu.vector_store %arg6[%c0_157, %c0_158], %408 {strides = array<i32>} : memref<16x128xf32, #tpu.memory_space<vmem>>, vector<16x128xf32>,
    return
  }
  func.func @transform_0(%arg0: i32) -> (i32, i32) {
    %c0_i32 = arith.constant 0 : i32
    %c0_i32_0 = arith.constant 0 : i32
    return %arg0, %c0_i32 : i32, i32
  }
  func.func @transform_1(%arg0: i32) -> (i32, i32) {
    %c0_i32 = arith.constant 0 : i32
    %c0_i32_0 = arith.constant 0 : i32
    %c0_i32_1 = arith.constant 0 : i32
    return %c0_i32, %c0_i32_0 : i32, i32
  }
  func.func @transform_2(%arg0: i32) -> (i32, i32) {
    %c0_i32 = arith.constant 0 : i32
    %c0_i32_0 = arith.constant 0 : i32
    %c0_i32_1 = arith.constant 0 : i32
    return %c0_i32, %c0_i32_0 : i32, i32
  }
  func.func @transform_3(%arg0: i32) -> (i32, i32) {
    %c0_i32 = arith.constant 0 : i32
    %c0_i32_0 = arith.constant 0 : i32
    %c0_i32_1 = arith.constant 0 : i32
    return %c0_i32, %c0_i32_0 : i32, i32
  }
  func.func @transform_4(%arg0: i32) -> (i32, i32) {
    %c0_i32 = arith.constant 0 : i32
    %c0_i32_0 = arith.constant 0 : i32
    %c0_i32_1 = arith.constant 0 : i32
    return %c0_i32, %c0_i32_0 : i32, i32
  }
  func.func @transform_5(%arg0: i32) -> (i32, i32) {
    %c0_i32 = arith.constant 0 : i32
    %c0_i32_0 = arith.constant 0 : i32
    return %arg0, %c0_i32 : i32, i32
  }
}

</mosaic_0001>

<llo_original>
// kernel: g2conv2d4.1
$region0: #{g2conv2d4.1}
  #allocation0 [shape = 'u32[]', space=smem, size = 0x4, offset = 0x4, fixed_abs, tag = 'smem constant byte address 0x4 - core index']
  #allocation1 [shape = 'u32[144,128]{1,0:T(1,128)}', space=vmem, size = 0x12000, scoped, tag = 'internal scratch']
  %s0 = inlined_call_operand.vmem [shape: f32[32,128], index: 0, kind: input, shape index: {}]
  %s1 = inlined_call_operand.vmem [shape: f32[1152,128], index: 1, kind: input, shape index: {}]
  %s2 = inlined_call_operand.vmem [shape: f32[1,128], index: 2, kind: input, shape index: {}]
  %s3 = inlined_call_operand.vmem [shape: f32[1152,128], index: 3, kind: input, shape index: {}]
  %s4 = inlined_call_operand.vmem [shape: f32[1,128], index: 4, kind: input, shape index: {}]
  %s5 = inlined_call_operand.vmem [shape: f32[32,128], index: 5, kind: output, shape index: {}]
  %s6 = sld [smem:[#allocation0]]
  $region53: #{g2conv2d4.1} parent=0
    _
  %s8 = ssub.s32 1, %s6
  %s9 = scalar_select 0, %s8, %s6
  loop: start=0, step=1, limit=4
  $region2: #{g2conv2d4.1} parent=0 // loop_pre_header
    _
  $region3: #{g2conv2d4.1} parent=0 // loop_header
    %s11 = sphi 0, %s15
    %p12 = scmp.ge.s32.totalorder %s11, 4
    %s21 = sphi 0, %s23
    %s24 = sphi 0, %s21
    %s25 = sphi 0, %s24
    %s41 = sphi 0, %s25
    %s45 = sphi 0, %s45
    %s47 = sphi 0, %s45
    %s48 = sphi 0, %s47
    %s62 = sphi 0, %s48
    %s66 = sphi 0, %s66
    %s68 = sphi 0, %s66
    %s69 = sphi 0, %s68
    %s83 = sphi 0, %s69
    %s87 = sphi 0, %s87
    %s89 = sphi 0, %s87
    %s90 = sphi 0, %s89
    %s104 = sphi 0, %s90
    %s108 = sphi 0, %s108
    %s110 = sphi 0, %s108
    %s111 = sphi 0, %s110
    %s125 = sphi 0, %s111
    %s131 = sphi 0, %s133
    %s134 = sphi 0, %s131
    %s135 = sphi 0, %s134
    %s151 = sphi 0, %s135
  $region4: #{g2conv2d4.1} parent=0 // loop_header_branch
    %14 = sbr.rel (%p12) target = $region8
  $region5: #{g2conv2d4.1} parent=0 // loop_body
    %s16 = ssub.s32 %s11, 1
    %s17 = ssub.s32 %s11, 2
    %s18 = sadd.s32 %s11, 1
    %s19 = ssub.s32 %s11, %s18
    %p20 = scmp.eq.s32.totalorder %s19, 0
    %s22 = sadd.s32 %s21, 1
    %s23 = scalar_select %p20, %s21, %s22
    %p26 = pneg %p20
    %p27 = scmp.eq.s32.totalorder %s11, 1
    %p28 = por %p26, %p27
    %p29 = scmp.ne.s32.totalorder %s21, %s24
    %p30 = scmp.eq.s32.totalorder %s11, 0
    %p31 = por %p29, %p30
    %p32 = scmp.ne.s32.totalorder %s21, %s24
    %p33 = scmp.eq.s32.totalorder %s16, 1
    %p34 = por %p32, %p33
    %p35 = scmp.ne.s32.totalorder %s24, %s25
    %p36 = scmp.eq.s32.totalorder %s16, 0
    %p37 = por %p35, %p36
    %p38 = scmp.ne.s32.totalorder %s24, %s25
    %p39 = scmp.eq.s32.totalorder %s17, 1
    %p40 = por %p38, %p39
    %p42 = scmp.ne.s32.totalorder %s25, %s41
    %p43 = scmp.eq.s32.totalorder %s17, 0
    %p44 = por %p42, %p43
    %s46 = sadd.s32 %s45, 1
    %p49 = scmp.eq.s32.totalorder %s11, 1
    %p50 = scmp.ne.s32.totalorder %s45, %s47
    %p51 = scmp.eq.s32.totalorder %s11, 0
    %p52 = por %p50, %p51
    %p53 = scmp.ne.s32.totalorder %s45, %s47
    %p54 = scmp.eq.s32.totalorder %s16, 1
    %p55 = por %p53, %p54
    %p56 = scmp.ne.s32.totalorder %s47, %s48
    %p57 = scmp.eq.s32.totalorder %s16, 0
    %p58 = por %p56, %p57
    %p59 = scmp.ne.s32.totalorder %s47, %s48
    %p60 = scmp.eq.s32.totalorder %s17, 1
    %p61 = por %p59, %p60
    %p63 = scmp.ne.s32.totalorder %s48, %s62
    %p64 = scmp.eq.s32.totalorder %s17, 0
    %p65 = por %p63, %p64
    %s67 = sadd.s32 %s66, 1
    %p70 = scmp.eq.s32.totalorder %s11, 1
    %p71 = scmp.ne.s32.totalorder %s66, %s68
    %p72 = scmp.eq.s32.totalorder %s11, 0
    %p73 = por %p71, %p72
    %p74 = scmp.ne.s32.totalorder %s66, %s68
    %p75 = scmp.eq.s32.totalorder %s16, 1
    %p76 = por %p74, %p75
    %p77 = scmp.ne.s32.totalorder %s68, %s69
    %p78 = scmp.eq.s32.totalorder %s16, 0
    %p79 = por %p77, %p78
    %p80 = scmp.ne.s32.totalorder %s68, %s69
    %p81 = scmp.eq.s32.totalorder %s17, 1
    %p82 = por %p80, %p81
    %p84 = scmp.ne.s32.totalorder %s69, %s83
    %p85 = scmp.eq.s32.totalorder %s17, 0
    %p86 = por %p84, %p85
    %s88 = sadd.s32 %s87, 1
    %p91 = scmp.eq.s32.totalorder %s11, 1
    %p92 = scmp.ne.s32.totalorder %s87, %s89
    %p93 = scmp.eq.s32.totalorder %s11, 0
    %p94 = por %p92, %p93
    %p95 = scmp.ne.s32.totalorder %s87, %s89
    %p96 = scmp.eq.s32.totalorder %s16, 1
    %p97 = por %p95, %p96
    %p98 = scmp.ne.s32.totalorder %s89, %s90
    %p99 = scmp.eq.s32.totalorder %s16, 0
    %p100 = por %p98, %p99
    %p101 = scmp.ne.s32.totalorder %s89, %s90
    %p102 = scmp.eq.s32.totalorder %s17, 1
    %p103 = por %p101, %p102
    %p105 = scmp.ne.s32.totalorder %s90, %s104
    %p106 = scmp.eq.s32.totalorder %s17, 0
    %p107 = por %p105, %p106
    %s109 = sadd.s32 %s108, 1
    %p112 = scmp.eq.s32.totalorder %s11, 1
    %p113 = scmp.ne.s32.totalorder %s108, %s110
    %p114 = scmp.eq.s32.totalorder %s11, 0
    %p115 = por %p113, %p114
    %p116 = scmp.ne.s32.totalorder %s108, %s110
    %p117 = scmp.eq.s32.totalorder %s16, 1
    %p118 = por %p116, %p117
    %p119 = scmp.ne.s32.totalorder %s110, %s111
    %p120 = scmp.eq.s32.totalorder %s16, 0
    %p121 = por %p119, %p120
    %p122 = scmp.ne.s32.totalorder %s110, %s111
    %p123 = scmp.eq.s32.totalorder %s17, 1
    %p124 = por %p122, %p123
    %p126 = scmp.ne.s32.totalorder %s111, %s125
    %p127 = scmp.eq.s32.totalorder %s17, 0
    %p128 = por %p126, %p127
    %s129 = ssub.s32 %s11, %s18
    %p130 = scmp.eq.s32.totalorder %s129, 0
    %s132 = sadd.s32 %s131, 1
    %s133 = scalar_select %p130, %s131, %s132
    %p136 = pneg %p130
    %p137 = scmp.eq.s32.totalorder %s11, 1
    %p138 = por %p136, %p137
    %p139 = scmp.ne.s32.totalorder %s131, %s134
    %p140 = scmp.eq.s32.totalorder %s11, 0
    %p141 = por %p139, %p140
    %p142 = scmp.ne.s32.totalorder %s131, %s134
    %p143 = scmp.eq.s32.totalorder %s16, 1
    %p144 = por %p142, %p143
    %p145 = scmp.ne.s32.totalorder %s134, %s135
    %p146 = scmp.eq.s32.totalorder %s16, 0
    %p147 = por %p145, %p146
    %p148 = scmp.ne.s32.totalorder %s134, %s135
    %p149 = scmp.eq.s32.totalorder %s17, 1
    %p150 = por %p148, %p149
    %p152 = scmp.ne.s32.totalorder %s135, %s151
    %p153 = scmp.eq.s32.totalorder %s17, 0
    %p154 = por %p152, %p153
    %p155 = scmp.le.s32.totalorder 1, %s11
    %p156 = scmp.lt.s32.totalorder %s11, 3
    %p157 = pnand %p155, %p156
    %p158 = pneg %p157
    // Predicated region
    $region9: #{g2conv2d4.1} parent=5 // pred_check
      _
    $region10: #{g2conv2d4.1} parent=5 // pred_check_branch
      %160 = sbr.rel (%p157) target = $region12
    $region11: #{g2conv2d4.1} parent=5 // pred_region
      %s161 = ssub.s32 %s11, 1
      // Predicated region
      $region13: #{g2conv2d4.1} parent=11 // pred_check
        %p162 = pneg %p58
      $region14: #{g2conv2d4.1} parent=11 // pred_check_branch
        %164 = sbr.rel (%p162) target = $region16
      $region15: #{g2conv2d4.1} parent=11 // pred_region
        _
      $region16: #{g2conv2d4.1} parent=11 // pred_fallthru
        _
      // Predicated region
      $region17: #{g2conv2d4.1} parent=11 // pred_check
        %p165 = pneg %p79
      $region18: #{g2conv2d4.1} parent=11 // pred_check_branch
        %167 = sbr.rel (%p165) target = $region20
      $region19: #{g2conv2d4.1} parent=11 // pred_region
        _
      $region20: #{g2conv2d4.1} parent=11 // pred_fallthru
        _
      // Predicated region
      $region21: #{g2conv2d4.1} parent=11 // pred_check
        %p168 = pneg %p100
      $region22: #{g2conv2d4.1} parent=11 // pred_check_branch
        %170 = sbr.rel (%p168) target = $region24
      $region23: #{g2conv2d4.1} parent=11 // pred_region
        _
      $region24: #{g2conv2d4.1} parent=11 // pred_fallthru
        _
      // Predicated region
      $region25: #{g2conv2d4.1} parent=11 // pred_check
        %p171 = pneg %p121
      $region26: #{g2conv2d4.1} parent=11 // pred_check_branch
        %173 = sbr.rel (%p171) target = $region28
      $region27: #{g2conv2d4.1} parent=11 // pred_region
        _
      $region28: #{g2conv2d4.1} parent=11 // pred_fallthru
        _
    $region12: #{g2conv2d4.1} parent=5 // pred_fallthru
      _
    %p174 = scmp.lt.s32.totalorder %s11, 2
    // Predicated region
    $region29: #{g2conv2d4.1} parent=5 // pred_check
      %p175 = pneg %p174
    $region30: #{g2conv2d4.1} parent=5 // pred_check_branch
      %177 = sbr.rel (%p175) target = $region32
    $region31: #{g2conv2d4.1} parent=5 // pred_region
      // Predicated region
      $region33: #{g2conv2d4.1} parent=31 // pred_check
        %p178 = pneg %p31
      $region34: #{g2conv2d4.1} parent=31 // pred_check_branch
        %180 = sbr.rel (%p178) target = $region36
      $region35: #{g2conv2d4.1} parent=31 // pred_region
        %s181 = smul.u32 2, %s11
        %p182 = scmp.lt.s32.totalorder %s181, 3
        %s183 = scalar_select %p182, %s181, 3
        %s184 = smul.addr %s183, 8
        %s185 = scalar_lea.vmem %s0, %s184
        %s186 = smul.u32 2, %s11
      $region36: #{g2conv2d4.1} parent=31 // pred_fallthru
        _
    $region32: #{g2conv2d4.1} parent=5 // pred_fallthru
      _
    %p187 = scmp.le.s32.totalorder 1, %s11
    %p188 = scmp.lt.s32.totalorder %s11, 3
    %p189 = pnand %p187, %p188
    %p190 = pneg %p189
    // Predicated region
    $region37: #{g2conv2d4.1} parent=5 // pred_check
      _
    $region38: #{g2conv2d4.1} parent=5 // pred_check_branch
      %192 = sbr.rel (%p189) target = $region40
    $region39: #{g2conv2d4.1} parent=5 // pred_region
      %s193 = ssub.s32 %s11, 1
      %s194 = smul.u32 2, %s16
      %p195 = scmp.lt.s32.totalorder %s194, 3
      %s196 = scalar_select %p195, %s194, 3
      %s197 = smul.addr %s196, 8
      %s198 = scalar_lea.vmem %s0, %s197
      %p199 = pneg %p37
      %p200 = pneg %p34
      %p201 = pneg %p58
      %p202 = pneg %p55
      %p203 = pneg %p79
      %p204 = pneg %p76
      %p205 = pneg %p100
      %p206 = pneg %p97
      %p207 = pneg %p121
      %p208 = pneg %p118
      %p209 = pneg %p147
      %p210 = pneg %p144
      %s211 = smul.u32 2, %s16
      %p212 = scmp.lt.s32.totalorder %s211, 3
      %s213 = scalar_select %p212, %s211, 3
      %s214 = smul.addr %s213, 8
      %s215 = scalar_lea.vmem %s5, %s214
      %s216 = smul.u32 2, %s16
      %p217 = scmp.lt.s32.totalorder %s216, 3
      %s218 = scalar_select %p217, %s216, 3
      %s219 = smul.addr %s218, 8
      %s220 = scalar_lea.vmem %s0, %s219
      %s221 = smul.u32 2, %s16
      %s222 = smul.u32 2, %s16
      %p223 = scmp.lt.s32.totalorder %s222, 3
      %s224 = scalar_select %p223, %s222, 3
      %s225 = smul.addr %s224, 8
      %s226 = scalar_lea.vmem %s5, %s225
      %s227 = smul.u32 2, %s16
      %v228 = vld [vmem:[%s220] sm:$0xff]
      %v229 = vld [vmem:[%s220 + $0x8] sm:$0xff]
      %v230 = vlaneseq
      %v231 = vand.u32 %v230, 127
      %v232 = vlaneseq
      %v233 = vshrl.u32 %v232, 7
      %v234 = vadd.s32 %v233, 8
      %v235 = vand.u32 %v231, 7
      %v236 = vshra.s32 %v231, 3
      %v237 = vand.u32 %v233, 15
      %v238 = vand.u32 %v234, 15
      %vm239 = vcmp.lt.s32.totalorder %v235, 4
      %v240 = vand.u32 %v235, 3
      %vm241 = vcmp.lt.s32.totalorder %v240, 2
      %vm242 = vmxor %vm239, 1
      %vm243 = vcmp.ge.s32.totalorder %v237, 1
      %vm244 = vcmp.ge.s32.totalorder %v238, 1
      %vm245 = vmand %vm242, %vm243
      %vm246 = vmand %vm242, %vm244
      %vm247 = vcmp.lt.s32.totalorder %v237, 15
      %vm248 = vcmp.lt.s32.totalorder %v238, 15
      %vm249 = vmand %vm239, %vm247
      %vm250 = vmand %vm239, %vm248
      %v251 = vrot.slane %v228, 7
      %v252 = vrot.slane %v229, 7
      %vm253 = vcmp.lt.s32.totalorder %v233, 1
      %v254 = vsel %vm253, %v251, %v252
      %v255 = vsel %vm253, %v252, %v251
      %v256 = vrot.slane %v228, 1
      %v257 = vrot.slane %v229, 1
      %vm258 = vcmp.lt.s32.totalorder %v233, 7
      %v259 = vsel %vm258, %v256, %v257
      %v260 = vsel %vm258, %v257, %v256
      %vm261 = vcmp.ge.f32.partialorder %v255, %v228
      %vm262 = vcmp.ge.f32.partialorder %v254, %v229
      %vm263 = vmand %vm245, %vm261
      %vm264 = vmand %vm246, %vm262
      %vm265 = vcmp.ge.f32.partialorder %v259, %v228
      %vm266 = vcmp.ge.f32.partialorder %v260, %v229
      %vm267 = vmand %vm249, %vm265
      %vm268 = vmand %vm250, %vm266
      %v269 = vsel %vm267, %v259, %v228
      %v270 = vsel %vm268, %v260, %v229
      %v271 = vsel %vm263, %v255, %v269
      %v272 = vsel %vm264, %v254, %v270
      %vm273 = vcmp.ge.s32.totalorder %v237, 2
      %vm274 = vcmp.ge.s32.totalorder %v238, 2
      %vm275 = vmand %vm242, %vm273
      %vm276 = vmand %vm242, %vm274
      %vm277 = vcmp.lt.s32.totalorder %v237, 14
      %vm278 = vcmp.lt.s32.totalorder %v238, 14
      %vm279 = vmand %vm239, %vm277
      %vm280 = vmand %vm239, %vm278
      %v281 = vrot.slane %v271, 6
      %v282 = vrot.slane %v272, 6
      %vm283 = vcmp.lt.s32.totalorder %v233, 2
      %v284 = vsel %vm283, %v281, %v282
      %v285 = vsel %vm283, %v282, %v281
      %v286 = vrot.slane %v271, 2
      %v287 = vrot.slane %v272, 2
      %vm288 = vcmp.lt.s32.totalorder %v233, 6
      %v289 = vsel %vm288, %v286, %v287
      %v290 = vsel %vm288, %v287, %v286
      %vm291 = vcmp.ge.f32.partialorder %v285, %v271
      %vm292 = vcmp.ge.f32.partialorder %v284, %v272
      %vm293 = vmand %vm275, %vm291
      %vm294 = vmand %vm276, %vm292
      %vm295 = vcmp.ge.f32.partialorder %v289, %v271
      %vm296 = vcmp.ge.f32.partialorder %v290, %v272
      %vm297 = vmand %vm279, %vm295
      %vm298 = vmand %vm280, %vm296
      %v299 = vsel %vm297, %v289, %v271
      %v300 = vsel %vm298, %v290, %v272
      %v301 = vsel %vm293, %v285, %v299
      %v302 = vsel %vm294, %v284, %v300
      %vm303 = vcmp.ge.s32.totalorder %v237, 4
      %vm304 = vcmp.ge.s32.totalorder %v238, 4
      %vm305 = vmand %vm242, %vm303
      %vm306 = vmand %vm242, %vm304
      %vm307 = vcmp.lt.s32.totalorder %v237, 12
      %vm308 = vcmp.lt.s32.totalorder %v238, 12
      %vm309 = vmand %vm239, %vm307
      %vm310 = vmand %vm239, %vm308
      %v311 = vrot.slane %v301, 4
      %v312 = vrot.slane %v302, 4
      %vm313 = vcmp.lt.s32.totalorder %v233, 4
      %v314 = vsel %vm313, %v311, %v312
      %v315 = vsel %vm313, %v312, %v311
      %vm316 = vcmp.ge.f32.partialorder %v315, %v301
      %vm317 = vcmp.ge.f32.partialorder %v314, %v302
      %vm318 = vmand %vm305, %vm316
      %vm319 = vmand %vm306, %vm317
      %vm320 = vcmp.ge.f32.partialorder %v314, %v301
      %vm321 = vcmp.ge.f32.partialorder %v315, %v302
      %vm322 = vmand %vm309, %vm320
      %vm323 = vmand %vm310, %vm321
      %v324 = vsel %vm322, %v314, %v301
      %v325 = vsel %vm323, %v315, %v302
      %v326 = vsel %vm318, %v315, %v324
      %v327 = vsel %vm319, %v314, %v325
      %vm328 = vcmp.ge.s32.totalorder %v237, 8
      %vm329 = vcmp.ge.s32.totalorder %v238, 8
      %vm330 = vmand %vm242, %vm328
      %vm331 = vmand %vm242, %vm329
      %vm332 = vcmp.lt.s32.totalorder %v237, 8
      %vm333 = vcmp.lt.s32.totalorder %v238, 8
      %vm334 = vmand %vm239, %vm332
      %vm335 = vmand %vm239, %vm333
      %vm336 = vmor %vm330, %vm334
      %vm337 = vmor %vm331, %vm335
      %vm338 = vcmp.ge.f32.partialorder %v327, %v326
      %vm339 = vcmp.ge.f32.partialorder %v326, %v327
      %vm340 = vmand %vm336, %vm338
      %vm341 = vmand %vm337, %vm339
      %v342 = vsel %vm340, %v327, %v326
      %v343 = vsel %vm341, %v326, %v327
      %vm344 = vmxor %vm241, 1
      %vm345 = vcmp.ge.s32.totalorder %v236, 1
      %vm346 = vmand %vm344, %vm345
      %vm347 = vcmp.lt.s32.totalorder %v236, 15
      %vm348 = vmand %vm241, %vm347
      %349 = vrot.lane.b32.xlu0 %v342, 8
      %v350 = vpop.permute.xlu0 %349
      %351 = vrot.lane.b32.xlu0 %v343, 8
      %v352 = vpop.permute.xlu0 %351
      %353 = vrot.lane.b32.xlu0 %v342, 120
      %v354 = vpop.permute.xlu0 %353
      %355 = vrot.lane.b32.xlu0 %v343, 120
      %v356 = vpop.permute.xlu0 %355
      %vm357 = vcmp.ge.f32.partialorder %v350, %v342
      %vm358 = vcmp.ge.f32.partialorder %v352, %v343
      %vm359 = vmand %vm346, %vm357
      %vm360 = vmand %vm346, %vm358
      %vm361 = vcmp.ge.f32.partialorder %v354, %v342
      %vm362 = vcmp.ge.f32.partialorder %v356, %v343
      %vm363 = vmand %vm348, %vm361
      %vm364 = vmand %vm348, %vm362
      %v365 = vsel %vm363, %v354, %v342
      %v366 = vsel %vm364, %v356, %v343
      %v367 = vsel %vm359, %v350, %v365
      %v368 = vsel %vm360, %v352, %v366
      %vm369 = vcmp.ge.s32.totalorder %v236, 2
      %vm370 = vmand %vm344, %vm369
      %vm371 = vcmp.lt.s32.totalorder %v236, 14
      %vm372 = vmand %vm241, %vm371
      %373 = vrot.lane.b32.xlu0 %v367, 16
      %v374 = vpop.permute.xlu0 %373
      %375 = vrot.lane.b32.xlu0 %v368, 16
      %v376 = vpop.permute.xlu0 %375
      %377 = vrot.lane.b32.xlu0 %v367, 112
      %v378 = vpop.permute.xlu0 %377
      %379 = vrot.lane.b32.xlu0 %v368, 112
      %v380 = vpop.permute.xlu0 %379
      %vm381 = vcmp.ge.f32.partialorder %v374, %v367
      %vm382 = vcmp.ge.f32.partialorder %v376, %v368
      %vm383 = vmand %vm370, %vm381
      %vm384 = vmand %vm370, %vm382
      %vm385 = vcmp.ge.f32.partialorder %v378, %v367
      %vm386 = vcmp.ge.f32.partialorder %v380, %v368
      %vm387 = vmand %vm372, %vm385
      %vm388 = vmand %vm372, %vm386
      %v389 = vsel %vm387, %v378, %v367
      %v390 = vsel %vm388, %v380, %v368
      %v391 = vsel %vm383, %v374, %v389
      %v392 = vsel %vm384, %v376, %v390
      %vm393 = vcmp.ge.s32.totalorder %v236, 4
      %vm394 = vmand %vm344, %vm393
      %vm395 = vcmp.lt.s32.totalorder %v236, 12
      %vm396 = vmand %vm241, %vm395
      %397 = vrot.lane.b32.xlu0 %v391, 32
      %v398 = vpop.permute.xlu0 %397
      %399 = vrot.lane.b32.xlu0 %v392, 32
      %v400 = vpop.permute.xlu0 %399
      %401 = vrot.lane.b32.xlu0 %v391, 96
      %v402 = vpop.permute.xlu0 %401
      %403 = vrot.lane.b32.xlu0 %v392, 96
      %v404 = vpop.permute.xlu0 %403
      %vm405 = vcmp.ge.f32.partialorder %v398, %v391
      %vm406 = vcmp.ge.f32.partialorder %v400, %v392
      %vm407 = vmand %vm394, %vm405
      %vm408 = vmand %vm394, %vm406
      %vm409 = vcmp.ge.f32.partialorder %v402, %v391
      %vm410 = vcmp.ge.f32.partialorder %v404, %v392
      %vm411 = vmand %vm396, %vm409
      %vm412 = vmand %vm396, %vm410
      %v413 = vsel %vm411, %v402, %v391
      %v414 = vsel %vm412, %v404, %v392
      %v415 = vsel %vm407, %v398, %v413
      %v416 = vsel %vm408, %v400, %v414
      %vm417 = vcmp.ge.s32.totalorder %v236, 8
      %vm418 = vmand %vm344, %vm417
      %vm419 = vcmp.lt.s32.totalorder %v236, 8
      %vm420 = vmand %vm241, %vm419
      %421 = vrot.lane.b32.xlu0 %v415, 64
      %v422 = vpop.permute.xlu0 %421
      %423 = vrot.lane.b32.xlu0 %v416, 64
      %v424 = vpop.permute.xlu0 %423
      %vm425 = vmor %vm418, %vm420
      %vm426 = vcmp.ge.f32.partialorder %v422, %v415
      %vm427 = vcmp.ge.f32.partialorder %v424, %v416
      %vm428 = vmand %vm425, %vm426
      %vm429 = vmand %vm425, %vm427
      %v430 = vsel %vm428, %v422, %v415
      %v431 = vsel %vm429, %v424, %v416
      %v432 = vrot.slane %v430, 7
      %v433 = vrot.slane %v431, 7
      %v434 = vsel %vm253, %v432, %v433
      %v435 = vsel %vm253, %v433, %v432
      %436 = vrot.lane.b32.xlu0 %v435, 8
      %v437 = vpop.permute.xlu0 %436
      %438 = vrot.lane.b32.xlu0 %v434, 8
      %v439 = vpop.permute.xlu0 %438
      %vm440 = vmand %vm243, %vm345
      %vm441 = vmand %vm244, %vm345
      %v442 = vsel %vm440, %v437, 0.0
      %v443 = vsel %vm441, %v439, 0.0
      %v444 = vsel %vm243, %v435, 0.0
      %v445 = vsel %vm244, %v434, 0.0
      %446 = vrot.lane.b32.xlu0 %v435, 120
      %v447 = vpop.permute.xlu0 %446
      %448 = vrot.lane.b32.xlu0 %v434, 120
      %v449 = vpop.permute.xlu0 %448
      %vm450 = vmand %vm243, %vm347
      %vm451 = vmand %vm244, %vm347
      %v452 = vsel %vm450, %v447, 0.0
      %v453 = vsel %vm451, %v449, 0.0
      %454 = vrot.lane.b32.xlu0 %v430, 8
      %v455 = vpop.permute.xlu0 %454
      %456 = vrot.lane.b32.xlu0 %v431, 8
      %v457 = vpop.permute.xlu0 %456
      %v458 = vsel %vm345, %v455, 0.0
      %v459 = vsel %vm345, %v457, 0.0
      %460 = vrot.lane.b32.xlu0 %v430, 120
      %v461 = vpop.permute.xlu0 %460
      %462 = vrot.lane.b32.xlu0 %v431, 120
      %v463 = vpop.permute.xlu0 %462
      %v464 = vsel %vm347, %v461, 0.0
      %v465 = vsel %vm347, %v463, 0.0
      %v466 = vrot.slane %v430, 1
      %v467 = vrot.slane %v431, 1
      %v468 = vsel %vm258, %v466, %v467
      %v469 = vsel %vm258, %v467, %v466
      %470 = vrot.lane.b32.xlu0 %v468, 8
      %v471 = vpop.permute.xlu0 %470
      %472 = vrot.lane.b32.xlu0 %v469, 8
      %v473 = vpop.permute.xlu0 %472
      %vm474 = vmand %vm247, %vm345
      %vm475 = vmand %vm248, %vm345
      %v476 = vsel %vm474, %v471, 0.0
      %v477 = vsel %vm475, %v473, 0.0
      %v478 = vsel %vm247, %v468, 0.0
      %v479 = vsel %vm248, %v469, 0.0
      %480 = vrot.lane.b32.xlu0 %v468, 120
      %v481 = vpop.permute.xlu0 %480
      %482 = vrot.lane.b32.xlu0 %v469, 120
      %v483 = vpop.permute.xlu0 %482
      %vm484 = vmand %vm247, %vm347
      %vm485 = vmand %vm248, %vm347
      %v486 = vsel %vm484, %v481, 0.0
      %v487 = vsel %vm485, %v483, 0.0
      %v488 = vld [vmem:[%s1] sm:$0xff]
      %v489 = vld [vmem:[%s1 + $0x8] sm:$0xff]
      %v490 = vld [vmem:[%s1 + $0x10] sm:$0xff]
      %v491 = vld [vmem:[%s1 + $0x18] sm:$0xff]
      %v492 = vld [vmem:[%s1 + $0x20] sm:$0xff]
      %v493 = vld [vmem:[%s1 + $0x28] sm:$0xff]
      %v494 = vld [vmem:[%s1 + $0x30] sm:$0xff]
      %v495 = vld [vmem:[%s1 + $0x38] sm:$0xff]
      %v496 = vld [vmem:[%s1 + $0x40] sm:$0xff]
      %v497 = vld [vmem:[%s1 + $0x48] sm:$0xff]
      %v498 = vld [vmem:[%s1 + $0x50] sm:$0xff]
      %v499 = vld [vmem:[%s1 + $0x58] sm:$0xff]
      %v500 = vld [vmem:[%s1 + $0x60] sm:$0xff]
      %v501 = vld [vmem:[%s1 + $0x68] sm:$0xff]
      %v502 = vld [vmem:[%s1 + $0x70] sm:$0xff]
      %v503 = vld [vmem:[%s1 + $0x78] sm:$0xff]
      %v504 = vld [vmem:[%s1 + $0x80] sm:$0xff]
      %v505 = vld [vmem:[%s1 + $0x88] sm:$0xff]
      %v506 = vld [vmem:[%s1 + $0x90] sm:$0xff]
      %v507 = vld [vmem:[%s1 + $0x98] sm:$0xff]
      %v508 = vld [vmem:[%s1 + $0xa0] sm:$0xff]
      %v509 = vld [vmem:[%s1 + $0xa8] sm:$0xff]
      %v510 = vld [vmem:[%s1 + $0xb0] sm:$0xff]
      %v511 = vld [vmem:[%s1 + $0xb8] sm:$0xff]
      %v512 = vld [vmem:[%s1 + $0xc0] sm:$0xff]
      %v513 = vld [vmem:[%s1 + $0xc8] sm:$0xff]
      %v514 = vld [vmem:[%s1 + $0xd0] sm:$0xff]
      %v515 = vld [vmem:[%s1 + $0xd8] sm:$0xff]
      %v516 = vld [vmem:[%s1 + $0xe0] sm:$0xff]
      %v517 = vld [vmem:[%s1 + $0xe8] sm:$0xff]
      %v518 = vld [vmem:[%s1 + $0xf0] sm:$0xff]
      %v519 = vld [vmem:[%s1 + $0xf8] sm:$0xff]
      %v520 = vld [vmem:[%s1 + $0x100] sm:$0xff]
      %v521 = vld [vmem:[%s1 + $0x108] sm:$0xff]
      %v522 = vld [vmem:[%s1 + $0x110] sm:$0xff]
      %v523 = vld [vmem:[%s1 + $0x118] sm:$0xff]
      %v524 = vld [vmem:[%s1 + $0x120] sm:$0xff]
      %v525 = vld [vmem:[%s1 + $0x128] sm:$0xff]
      %v526 = vld [vmem:[%s1 + $0x130] sm:$0xff]
      %v527 = vld [vmem:[%s1 + $0x138] sm:$0xff]
      %v528 = vld [vmem:[%s1 + $0x140] sm:$0xff]
      %v529 = vld [vmem:[%s1 + $0x148] sm:$0xff]
      %v530 = vld [vmem:[%s1 + $0x150] sm:$0xff]
      %v531 = vld [vmem:[%s1 + $0x158] sm:$0xff]
      %v532 = vld [vmem:[%s1 + $0x160] sm:$0xff]
      %v533 = vld [vmem:[%s1 + $0x168] sm:$0xff]
      %v534 = vld [vmem:[%s1 + $0x170] sm:$0xff]
      %v535 = vld [vmem:[%s1 + $0x178] sm:$0xff]
      %v536 = vld [vmem:[%s1 + $0x180] sm:$0xff]
      %v537 = vld [vmem:[%s1 + $0x188] sm:$0xff]
      %v538 = vld [vmem:[%s1 + $0x190] sm:$0xff]
      %v539 = vld [vmem:[%s1 + $0x198] sm:$0xff]
      %v540 = vld [vmem:[%s1 + $0x1a0] sm:$0xff]
      %v541 = vld [vmem:[%s1 + $0x1a8] sm:$0xff]
      %v542 = vld [vmem:[%s1 + $0x1b0] sm:$0xff]
      %v543 = vld [vmem:[%s1 + $0x1b8] sm:$0xff]
      %v544 = vld [vmem:[%s1 + $0x1c0] sm:$0xff]
      %v545 = vld [vmem:[%s1 + $0x1c8] sm:$0xff]
      %v546 = vld [vmem:[%s1 + $0x1d0] sm:$0xff]
      %v547 = vld [vmem:[%s1 + $0x1d8] sm:$0xff]
      %v548 = vld [vmem:[%s1 + $0x1e0] sm:$0xff]
      %v549 = vld [vmem:[%s1 + $0x1e8] sm:$0xff]
      %v550 = vld [vmem:[%s1 + $0x1f0] sm:$0xff]
      %v551 = vld [vmem:[%s1 + $0x1f8] sm:$0xff]
      %v552 = vld [vmem:[%s1 + $0x200] sm:$0xff]
      %v553 = vld [vmem:[%s1 + $0x208] sm:$0xff]
      %v554 = vld [vmem:[%s1 + $0x210] sm:$0xff]
      %v555 = vld [vmem:[%s1 + $0x218] sm:$0xff]
      %v556 = vld [vmem:[%s1 + $0x220] sm:$0xff]
      %v557 = vld [vmem:[%s1 + $0x228] sm:$0xff]
      %v558 = vld [vmem:[%s1 + $0x230] sm:$0xff]
      %v559 = vld [vmem:[%s1 + $0x238] sm:$0xff]
      %v560 = vld [vmem:[%s1 + $0x240] sm:$0xff]
      %v561 = vld [vmem:[%s1 + $0x248] sm:$0xff]
      %v562 = vld [vmem:[%s1 + $0x250] sm:$0xff]
      %v563 = vld [vmem:[%s1 + $0x258] sm:$0xff]
      %v564 = vld [vmem:[%s1 + $0x260] sm:$0xff]
      %v565 = vld [vmem:[%s1 + $0x268] sm:$0xff]
      %v566 = vld [vmem:[%s1 + $0x270] sm:$0xff]
      %v567 = vld [vmem:[%s1 + $0x278] sm:$0xff]
      %v568 = vld [vmem:[%s1 + $0x280] sm:$0xff]
      %v569 = vld [vmem:[%s1 + $0x288] sm:$0xff]
      %v570 = vld [vmem:[%s1 + $0x290] sm:$0xff]
      %v571 = vld [vmem:[%s1 + $0x298] sm:$0xff]
      %v572 = vld [vmem:[%s1 + $0x2a0] sm:$0xff]
      %v573 = vld [vmem:[%s1 + $0x2a8] sm:$0xff]
      %v574 = vld [vmem:[%s1 + $0x2b0] sm:$0xff]
      %v575 = vld [vmem:[%s1 + $0x2b8] sm:$0xff]
      %v576 = vld [vmem:[%s1 + $0x2c0] sm:$0xff]
      %v577 = vld [vmem:[%s1 + $0x2c8] sm:$0xff]
      %v578 = vld [vmem:[%s1 + $0x2d0] sm:$0xff]
      %v579 = vld [vmem:[%s1 + $0x2d8] sm:$0xff]
      %v580 = vld [vmem:[%s1 + $0x2e0] sm:$0xff]
      %v581 = vld [vmem:[%s1 + $0x2e8] sm:$0xff]
      %v582 = vld [vmem:[%s1 + $0x2f0] sm:$0xff]
      %v583 = vld [vmem:[%s1 + $0x2f8] sm:$0xff]
      %v584 = vld [vmem:[%s1 + $0x300] sm:$0xff]
      %v585 = vld [vmem:[%s1 + $0x308] sm:$0xff]
      %v586 = vld [vmem:[%s1 + $0x310] sm:$0xff]
      %v587 = vld [vmem:[%s1 + $0x318] sm:$0xff]
      %v588 = vld [vmem:[%s1 + $0x320] sm:$0xff]
      %v589 = vld [vmem:[%s1 + $0x328] sm:$0xff]
      %v590 = vld [vmem:[%s1 + $0x330] sm:$0xff]
      %v591 = vld [vmem:[%s1 + $0x338] sm:$0xff]
      %v592 = vld [vmem:[%s1 + $0x340] sm:$0xff]
      %v593 = vld [vmem:[%s1 + $0x348] sm:$0xff]
      %v594 = vld [vmem:[%s1 + $0x350] sm:$0xff]
      %v595 = vld [vmem:[%s1 + $0x358] sm:$0xff]
      %v596 = vld [vmem:[%s1 + $0x360] sm:$0xff]
      %v597 = vld [vmem:[%s1 + $0x368] sm:$0xff]
      %v598 = vld [vmem:[%s1 + $0x370] sm:$0xff]
      %v599 = vld [vmem:[%s1 + $0x378] sm:$0xff]
      %v600 = vld [vmem:[%s1 + $0x380] sm:$0xff]
      %v601 = vld [vmem:[%s1 + $0x388] sm:$0xff]
      %v602 = vld [vmem:[%s1 + $0x390] sm:$0xff]
      %v603 = vld [vmem:[%s1 + $0x398] sm:$0xff]
      %v604 = vld [vmem:[%s1 + $0x3a0] sm:$0xff]
      %v605 = vld [vmem:[%s1 + $0x3a8] sm:$0xff]
      %v606 = vld [vmem:[%s1 + $0x3b0] sm:$0xff]
      %v607 = vld [vmem:[%s1 + $0x3b8] sm:$0xff]
      %v608 = vld [vmem:[%s1 + $0x3c0] sm:$0xff]
      %v609 = vld [vmem:[%s1 + $0x3c8] sm:$0xff]
      %v610 = vld [vmem:[%s1 + $0x3d0] sm:$0xff]
      %v611 = vld [vmem:[%s1 + $0x3d8] sm:$0xff]
      %v612 = vld [vmem:[%s1 + $0x3e0] sm:$0xff]
      %v613 = vld [vmem:[%s1 + $0x3e8] sm:$0xff]
      %v614 = vld [vmem:[%s1 + $0x3f0] sm:$0xff]
      %v615 = vld [vmem:[%s1 + $0x3f8] sm:$0xff]
      %v616 = vld [vmem:[%s1 + $0x400] sm:$0xff]
      %v617 = vld [vmem:[%s1 + $0x408] sm:$0xff]
      %v618 = vld [vmem:[%s1 + $0x410] sm:$0xff]
      %v619 = vld [vmem:[%s1 + $0x418] sm:$0xff]
      %v620 = vld [vmem:[%s1 + $0x420] sm:$0xff]
      %v621 = vld [vmem:[%s1 + $0x428] sm:$0xff]
      %v622 = vld [vmem:[%s1 + $0x430] sm:$0xff]
      %v623 = vld [vmem:[%s1 + $0x438] sm:$0xff]
      %v624 = vld [vmem:[%s1 + $0x440] sm:$0xff]
      %v625 = vld [vmem:[%s1 + $0x448] sm:$0xff]
      %v626 = vld [vmem:[%s1 + $0x450] sm:$0xff]
      %v627 = vld [vmem:[%s1 + $0x458] sm:$0xff]
      %v628 = vld [vmem:[%s1 + $0x460] sm:$0xff]
      %v629 = vld [vmem:[%s1 + $0x468] sm:$0xff]
      %v630 = vld [vmem:[%s1 + $0x470] sm:$0xff]
      %v631 = vld [vmem:[%s1 + $0x478] sm:$0xff]
      %v632 = vld [vmem:[%s2] sm:$0x1]
      %v634 = vlaneseq
      %v635 = vshrl.u32 %v634, 7
      %v636 = vsub.s32 0, %v635
      %v637 = vrot.slane %v632, %v636
      %639 = vmatprep.subr.mxu0 0.0
      %640 = vmatpush1.msra.mxu0 %v488
      %641 = vmatprep.subr.mxu0 0.0
      %642 = vmatpush1.msra.mxu0 %v489
      %643 = vmatprep.subr.mxu0 0.0
      %644 = vmatpush1.msra.mxu0 %v490
      %645 = vmatprep.subr.mxu0 0.0
      %646 = vmatpush1.msra.mxu0 %v491
      %647 = vmatprep.subr.mxu0 0.0
      %648 = vmatpush1.msra.mxu0 %v492
      %649 = vmatprep.subr.mxu0 0.0
      %650 = vmatpush1.msra.mxu0 %v493
      %651 = vmatprep.subr.mxu0 0.0
      %652 = vmatpush1.msra.mxu0 %v494
      %653 = vmatprep.subr.mxu0 0.0
      %654 = vmatpush1.msra.mxu0 %v495
      %655 = vmatprep.subr.mxu0 0.0
      %656 = vmatpush1.msra.mxu0 %v496
      %657 = vmatprep.subr.mxu0 0.0
      %658 = vmatpush1.msra.mxu0 %v497
      %659 = vmatprep.subr.mxu0 0.0
      %660 = vmatpush1.msra.mxu0 %v498
      %661 = vmatprep.subr.mxu0 0.0
      %662 = vmatpush1.msra.mxu0 %v499
      %663 = vmatprep.subr.mxu0 0.0
      %664 = vmatpush1.msra.mxu0 %v500
      %665 = vmatprep.subr.mxu0 0.0
      %666 = vmatpush1.msra.mxu0 %v501
      %667 = vmatprep.subr.mxu0 0.0
      %668 = vmatpush1.msra.mxu0 %v502
      %669 = vmatprep.subr.mxu0 0.0
      %670 = vmatpush1.msra.mxu0 %v503
      %671 = vmatprep.subr.mxu0 0.0
      %672 = vmatpush1.msra.mxu0 %v504
      %673 = vmatprep.subr.mxu0 0.0
      %674 = vmatpush1.msra.mxu0 %v505
      %675 = vmatprep.subr.mxu0 0.0
      %676 = vmatpush1.msra.mxu0 %v506
      %677 = vmatprep.subr.mxu0 0.0
      %678 = vmatpush1.msra.mxu0 %v507
      %679 = vmatprep.subr.mxu0 0.0
      %680 = vmatpush1.msra.mxu0 %v508
      %681 = vmatprep.subr.mxu0 0.0
      %682 = vmatpush1.msra.mxu0 %v509
      %683 = vmatprep.subr.mxu0 0.0
      %684 = vmatpush1.msra.mxu0 %v510
      %685 = vmatprep.subr.mxu0 0.0
      %686 = vmatpush1.msra.mxu0 %v511
      %687 = vmatprep.subr.mxu0 0.0
      %688 = vmatpush1.msra.mxu0 %v512
      %689 = vmatprep.subr.mxu0 0.0
      %690 = vmatpush1.msra.mxu0 %v513
      %691 = vmatprep.subr.mxu0 0.0
      %692 = vmatpush1.msra.mxu0 %v514
      %693 = vmatprep.subr.mxu0 0.0
      %694 = vmatpush1.msra.mxu0 %v515
      %695 = vmatprep.subr.mxu0 0.0
      %696 = vmatpush1.msra.mxu0 %v516
      %697 = vmatprep.subr.mxu0 0.0
      %698 = vmatpush1.msra.mxu0 %v517
      %699 = vmatprep.subr.mxu0 0.0
      %700 = vmatpush1.msra.mxu0 %v518
      %701 = vmatprep.subr.mxu0 0.0
      %702 = vmatpush1.msra.mxu0 %v519
      %703 = vmatprep.mubr.f32.mxu0 %v444
      %704 = vmatmul.mubr.f32.gmra.mrb[0].mxu0 %v442
      %v705 = vpop.f32.mrb[0].mxu0
      %v706 = vadd.f32 %v637, %v705
      %v707 = vpop.f32.mrb[0].mxu0
      %708 = vmatprep.mubr.f32.mxu0 %v445
      %709 = vmatmul.mubr.f32.gmra.mrb[0].mxu0 %v443
      %v710 = vpop.f32.mrb[0].mxu0
      %v711 = vadd.f32 %v637, %v710
      %v712 = vpop.f32.mrb[0].mxu0
      %713 = vdwg.mxu0
      %714 = vmatprep.subr.mxu0 0.0
      %715 = vmatpush1.msra.mxu0 %v520
      %716 = vmatprep.subr.mxu0 0.0
      %717 = vmatpush1.msra.mxu0 %v521
      %718 = vmatprep.subr.mxu0 0.0
      %719 = vmatpush1.msra.mxu0 %v522
      %720 = vmatprep.subr.mxu0 0.0
      %721 = vmatpush1.msra.mxu0 %v523
      %722 = vmatprep.subr.mxu0 0.0
      %723 = vmatpush1.msra.mxu0 %v524
      %724 = vmatprep.subr.mxu0 0.0
      %725 = vmatpush1.msra.mxu0 %v525
      %726 = vmatprep.subr.mxu0 0.0
      %727 = vmatpush1.msra.mxu0 %v526
      %728 = vmatprep.subr.mxu0 0.0
      %729 = vmatpush1.msra.mxu0 %v527
      %730 = vmatprep.subr.mxu0 0.0
      %731 = vmatpush1.msra.mxu0 %v528
      %732 = vmatprep.subr.mxu0 0.0
      %733 = vmatpush1.msra.mxu0 %v529
      %734 = vmatprep.subr.mxu0 0.0
      %735 = vmatpush1.msra.mxu0 %v530
      %736 = vmatprep.subr.mxu0 0.0
      %737 = vmatpush1.msra.mxu0 %v531
      %738 = vmatprep.subr.mxu0 0.0
      %739 = vmatpush1.msra.mxu0 %v532
      %740 = vmatprep.subr.mxu0 0.0
      %741 = vmatpush1.msra.mxu0 %v533
      %742 = vmatprep.subr.mxu0 0.0
      %743 = vmatpush1.msra.mxu0 %v534
      %744 = vmatprep.subr.mxu0 0.0
      %745 = vmatpush1.msra.mxu0 %v535
      %746 = vmatprep.subr.mxu0 0.0
      %747 = vmatpush1.msra.mxu0 %v536
      %748 = vmatprep.subr.mxu0 0.0
      %749 = vmatpush1.msra.mxu0 %v537
      %750 = vmatprep.subr.mxu0 0.0
      %751 = vmatpush1.msra.mxu0 %v538
      %752 = vmatprep.subr.mxu0 0.0
      %753 = vmatpush1.msra.mxu0 %v539
      %754 = vmatprep.subr.mxu0 0.0
      %755 = vmatpush1.msra.mxu0 %v540
      %756 = vmatprep.subr.mxu0 0.0
      %757 = vmatpush1.msra.mxu0 %v541
      %758 = vmatprep.subr.mxu0 0.0
      %759 = vmatpush1.msra.mxu0 %v542
      %760 = vmatprep.subr.mxu0 0.0
      %761 = vmatpush1.msra.mxu0 %v543
      %762 = vmatprep.subr.mxu0 0.0
      %763 = vmatpush1.msra.mxu0 %v544
      %764 = vmatprep.subr.mxu0 0.0
      %765 = vmatpush1.msra.mxu0 %v545
      %766 = vmatprep.subr.mxu0 0.0
      %767 = vmatpush1.msra.mxu0 %v546
      %768 = vmatprep.subr.mxu0 0.0
      %769 = vmatpush1.msra.mxu0 %v547
      %770 = vmatprep.subr.mxu0 0.0
      %771 = vmatpush1.msra.mxu0 %v548
      %772 = vmatprep.subr.mxu0 0.0
      %773 = vmatpush1.msra.mxu0 %v549
      %774 = vmatprep.subr.mxu0 0.0
      %775 = vmatpush1.msra.mxu0 %v550
      %776 = vmatprep.subr.mxu0 0.0
      %777 = vmatpush1.msra.mxu0 %v551
      %778 = vmatprep.mubr.f32.mxu0 %v458
      %779 = vmatmul.mubr.f32.gmra.mrb[0].mxu0 %v452
      %v780 = vpop.f32.mrb[0].mxu0
      %v781 = vadd.f32 %v706, %v780
      %v782 = vpop.f32.mrb[0].mxu0
      %783 = vmatprep.mubr.f32.mxu0 %v459
      %784 = vmatmul.mubr.f32.gmra.mrb[0].mxu0 %v453
      %v785 = vpop.f32.mrb[0].mxu0
      %v786 = vadd.f32 %v711, %v785
      %v787 = vpop.f32.mrb[0].mxu0
      %788 = vdwg.mxu0
      %789 = vmatprep.subr.mxu0 0.0
      %790 = vmatpush1.msra.mxu0 %v552
      %791 = vmatprep.subr.mxu0 0.0
      %792 = vmatpush1.msra.mxu0 %v553
      %793 = vmatprep.subr.mxu0 0.0
      %794 = vmatpush1.msra.mxu0 %v554
      %795 = vmatprep.subr.mxu0 0.0
      %796 = vmatpush1.msra.mxu0 %v555
      %797 = vmatprep.subr.mxu0 0.0
      %798 = vmatpush1.msra.mxu0 %v556
      %799 = vmatprep.subr.mxu0 0.0
      %800 = vmatpush1.msra.mxu0 %v557
      %801 = vmatprep.subr.mxu0 0.0
      %802 = vmatpush1.msra.mxu0 %v558
      %803 = vmatprep.subr.mxu0 0.0
      %804 = vmatpush1.msra.mxu0 %v559
      %805 = vmatprep.subr.mxu0 0.0
      %806 = vmatpush1.msra.mxu0 %v560
      %807 = vmatprep.subr.mxu0 0.0
      %808 = vmatpush1.msra.mxu0 %v561
      %809 = vmatprep.subr.mxu0 0.0
      %810 = vmatpush1.msra.mxu0 %v562
      %811 = vmatprep.subr.mxu0 0.0
      %812 = vmatpush1.msra.mxu0 %v563
      %813 = vmatprep.subr.mxu0 0.0
      %814 = vmatpush1.msra.mxu0 %v564
      %815 = vmatprep.subr.mxu0 0.0
      %816 = vmatpush1.msra.mxu0 %v565
      %817 = vmatprep.subr.mxu0 0.0
      %818 = vmatpush1.msra.mxu0 %v566
      %819 = vmatprep.subr.mxu0 0.0
      %820 = vmatpush1.msra.mxu0 %v567
      %821 = vmatprep.subr.mxu0 0.0
      %822 = vmatpush1.msra.mxu0 %v568
      %823 = vmatprep.subr.mxu0 0.0
      %824 = vmatpush1.msra.mxu0 %v569
      %825 = vmatprep.subr.mxu0 0.0
      %826 = vmatpush1.msra.mxu0 %v570
      %827 = vmatprep.subr.mxu0 0.0
      %828 = vmatpush1.msra.mxu0 %v571
      %829 = vmatprep.subr.mxu0 0.0
      %830 = vmatpush1.msra.mxu0 %v572
      %831 = vmatprep.subr.mxu0 0.0
      %832 = vmatpush1.msra.mxu0 %v573
      %833 = vmatprep.subr.mxu0 0.0
      %834 = vmatpush1.msra.mxu0 %v574
      %835 = vmatprep.subr.mxu0 0.0
      %836 = vmatpush1.msra.mxu0 %v575
      %837 = vmatprep.subr.mxu0 0.0
      %838 = vmatpush1.msra.mxu0 %v576
      %839 = vmatprep.subr.mxu0 0.0
      %840 = vmatpush1.msra.mxu0 %v577
      %841 = vmatprep.subr.mxu0 0.0
      %842 = vmatpush1.msra.mxu0 %v578
      %843 = vmatprep.subr.mxu0 0.0
      %844 = vmatpush1.msra.mxu0 %v579
      %845 = vmatprep.subr.mxu0 0.0
      %846 = vmatpush1.msra.mxu0 %v580
      %847 = vmatprep.subr.mxu0 0.0
      %848 = vmatpush1.msra.mxu0 %v581
      %849 = vmatprep.subr.mxu0 0.0
      %850 = vmatpush1.msra.mxu0 %v582
      %851 = vmatprep.subr.mxu0 0.0
      %852 = vmatpush1.msra.mxu0 %v583
      %853 = vmatprep.mubr.f32.mxu0 %v464
      %854 = vmatmul.mubr.f32.gmra.mrb[0].mxu0 %v430
      %v855 = vpop.f32.mrb[0].mxu0
      %v856 = vadd.f32 %v781, %v855
      %v857 = vpop.f32.mrb[0].mxu0
      %858 = vmatprep.mubr.f32.mxu0 %v465
      %859 = vmatmul.mubr.f32.gmra.mrb[0].mxu0 %v431
      %v860 = vpop.f32.mrb[0].mxu0
      %v861 = vadd.f32 %v786, %v860
      %v862 = vpop.f32.mrb[0].mxu0
      %863 = vdwg.mxu0
      %864 = vmatprep.subr.mxu0 0.0
      %865 = vmatpush1.msra.mxu0 %v584
      %866 = vmatprep.subr.mxu0 0.0
      %867 = vmatpush1.msra.mxu0 %v585
      %868 = vmatprep.subr.mxu0 0.0
      %869 = vmatpush1.msra.mxu0 %v586
      %870 = vmatprep.subr.mxu0 0.0
      %871 = vmatpush1.msra.mxu0 %v587
      %872 = vmatprep.subr.mxu0 0.0
      %873 = vmatpush1.msra.mxu0 %v588
      %874 = vmatprep.subr.mxu0 0.0
      %875 = vmatpush1.msra.mxu0 %v589
      %876 = vmatprep.subr.mxu0 0.0
      %877 = vmatpush1.msra.mxu0 %v590
      %878 = vmatprep.subr.mxu0 0.0
      %879 = vmatpush1.msra.mxu0 %v591
      %880 = vmatprep.subr.mxu0 0.0
      %881 = vmatpush1.msra.mxu0 %v592
      %882 = vmatprep.subr.mxu0 0.0
      %883 = vmatpush1.msra.mxu0 %v593
      %884 = vmatprep.subr.mxu0 0.0
      %885 = vmatpush1.msra.mxu0 %v594
      %886 = vmatprep.subr.mxu0 0.0
      %887 = vmatpush1.msra.mxu0 %v595
      %888 = vmatprep.subr.mxu0 0.0
      %889 = vmatpush1.msra.mxu0 %v596
      %890 = vmatprep.subr.mxu0 0.0
      %891 = vmatpush1.msra.mxu0 %v597
      %892 = vmatprep.subr.mxu0 0.0
      %893 = vmatpush1.msra.mxu0 %v598
      %894 = vmatprep.subr.mxu0 0.0
      %895 = vmatpush1.msra.mxu0 %v599
      %896 = vmatprep.subr.mxu0 0.0
      %897 = vmatpush1.msra.mxu0 %v600
      %898 = vmatprep.subr.mxu0 0.0
      %899 = vmatpush1.msra.mxu0 %v601
      %900 = vmatprep.subr.mxu0 0.0
      %901 = vmatpush1.msra.mxu0 %v602
      %902 = vmatprep.subr.mxu0 0.0
      %903 = vmatpush1.msra.mxu0 %v603
      %904 = vmatprep.subr.mxu0 0.0
      %905 = vmatpush1.msra.mxu0 %v604
      %906 = vmatprep.subr.mxu0 0.0
      %907 = vmatpush1.msra.mxu0 %v605
      %908 = vmatprep.subr.mxu0 0.0
      %909 = vmatpush1.msra.mxu0 %v606
      %910 = vmatprep.subr.mxu0 0.0
      %911 = vmatpush1.msra.mxu0 %v607
      %912 = vmatprep.subr.mxu0 0.0
      %913 = vmatpush1.msra.mxu0 %v608
      %914 = vmatprep.subr.mxu0 0.0
      %915 = vmatpush1.msra.mxu0 %v609
      %916 = vmatprep.subr.mxu0 0.0
      %917 = vmatpush1.msra.mxu0 %v610
      %918 = vmatprep.subr.mxu0 0.0
      %919 = vmatpush1.msra.mxu0 %v611
      %920 = vmatprep.subr.mxu0 0.0
      %921 = vmatpush1.msra.mxu0 %v612
      %922 = vmatprep.subr.mxu0 0.0
      %923 = vmatpush1.msra.mxu0 %v613
      %924 = vmatprep.subr.mxu0 0.0
      %925 = vmatpush1.msra.mxu0 %v614
      %926 = vmatprep.subr.mxu0 0.0
      %927 = vmatpush1.msra.mxu0 %v615
      %928 = vmatprep.mubr.f32.mxu0 %v478
      %929 = vmatmul.mubr.f32.gmra.mrb[0].mxu0 %v476
      %v930 = vpop.f32.mrb[0].mxu0
      %v931 = vadd.f32 %v856, %v930
      %v932 = vpop.f32.mrb[0].mxu0
      %933 = vmatprep.mubr.f32.mxu0 %v479
      %934 = vmatmul.mubr.f32.gmra.mrb[0].mxu0 %v477
      %v935 = vpop.f32.mrb[0].mxu0
      %v936 = vadd.f32 %v861, %v935
      %v937 = vpop.f32.mrb[0].mxu0
      %938 = vdwg.mxu0
      %939 = vmatprep.subr.mxu0 0.0
      %940 = vmatpush1.msra.mxu0 %v616
      %941 = vmatprep.subr.mxu0 0.0
      %942 = vmatpush1.msra.mxu0 %v617
      %943 = vmatprep.subr.mxu0 0.0
      %944 = vmatpush1.msra.mxu0 %v618
      %945 = vmatprep.subr.mxu0 0.0
      %946 = vmatpush1.msra.mxu0 %v619
      %947 = vmatprep.subr.mxu0 0.0
      %948 = vmatpush1.msra.mxu0 %v620
      %949 = vmatprep.subr.mxu0 0.0
      %950 = vmatpush1.msra.mxu0 %v621
      %951 = vmatprep.subr.mxu0 0.0
      %952 = vmatpush1.msra.mxu0 %v622
      %953 = vmatprep.subr.mxu0 0.0
      %954 = vmatpush1.msra.mxu0 %v623
      %955 = vmatprep.subr.mxu0 0.0
      %956 = vmatpush1.msra.mxu0 %v624
      %957 = vmatprep.subr.mxu0 0.0
      %958 = vmatpush1.msra.mxu0 %v625
      %959 = vmatprep.subr.mxu0 0.0
      %960 = vmatpush1.msra.mxu0 %v626
      %961 = vmatprep.subr.mxu0 0.0
      %962 = vmatpush1.msra.mxu0 %v627
      %963 = vmatprep.subr.mxu0 0.0
      %964 = vmatpush1.msra.mxu0 %v628
      %965 = vmatprep.subr.mxu0 0.0
      %966 = vmatpush1.msra.mxu0 %v629
      %967 = vmatprep.subr.mxu0 0.0
      %968 = vmatpush1.msra.mxu0 %v630
      %969 = vmatprep.subr.mxu0 0.0
      %970 = vmatpush1.msra.mxu0 %v631
      %971 = vmatprep.subr.mxu0 0.0
      %972 = vmatpush1.msra.mxu0 0.0
      %973 = vmatprep.subr.mxu0 0.0
      %974 = vmatpush1.msra.mxu0 0.0
      %975 = vmatprep.subr.mxu0 0.0
      %976 = vmatpush1.msra.mxu0 0.0
      %977 = vmatprep.subr.mxu0 0.0
      %978 = vmatpush1.msra.mxu0 0.0
      %979 = vmatprep.subr.mxu0 0.0
      %980 = vmatpush1.msra.mxu0 0.0
      %981 = vmatprep.subr.mxu0 0.0
      %982 = vmatpush1.msra.mxu0 0.0
      %983 = vmatprep.subr.mxu0 0.0
      %984 = vmatpush1.msra.mxu0 0.0
      %985 = vmatprep.subr.mxu0 0.0
      %986 = vmatpush1.msra.mxu0 0.0
      %987 = vmatprep.subr.mxu0 0.0
      %988 = vmatpush1.msra.mxu0 0.0
      %989 = vmatprep.subr.mxu0 0.0
      %990 = vmatpush1.msra.mxu0 0.0
      %991 = vmatprep.subr.mxu0 0.0
      %992 = vmatpush1.msra.mxu0 0.0
      %993 = vmatprep.subr.mxu0 0.0
      %994 = vmatpush1.msra.mxu0 0.0
      %995 = vmatprep.subr.mxu0 0.0
      %996 = vmatpush1.msra.mxu0 0.0
      %997 = vmatprep.subr.mxu0 0.0
      %998 = vmatpush1.msra.mxu0 0.0
      %999 = vmatprep.subr.mxu0 0.0
      %1000 = vmatpush1.msra.mxu0 0.0
      %1001 = vmatprep.subr.mxu0 0.0
      %1002 = vmatpush1.msra.mxu0 0.0
      %1003 = vmatprep.mubr.f32.mxu0 0.0
      %1004 = vmatmul.mubr.f32.gmra.mrb[0].mxu0 %v486
      %v1005 = vpop.f32.mrb[0].mxu0
      %v1006 = vadd.f32 %v931, %v1005
      %v1007 = vpop.f32.mrb[0].mxu0
      %1008 = vmatprep.mubr.f32.mxu0 0.0
      %1009 = vmatmul.mubr.f32.gmra.mrb[0].mxu0 %v487
      %v1010 = vpop.f32.mrb[0].mxu0
      %v1011 = vadd.f32 %v936, %v1010
      %v1012 = vpop.f32.mrb[0].mxu0
      %1013 = vdwg.mxu0
      %v1014 = vrot.slane %v1006, 7
      %v1015 = vrot.slane %v1011, 7
      %v1016 = vsel %vm253, %v1014, %v1015
      %v1017 = vsel %vm253, %v1015, %v1014
      %v1018 = vrot.slane %v1006, 1
      %v1019 = vrot.slane %v1011, 1
      %v1020 = vsel %vm258, %v1018, %v1019
      %v1021 = vsel %vm258, %v1019, %v1018
      %v1022 = vsel %vm267, %v1020, %v1006
      %v1023 = vsel %vm268, %v1021, %v1011
      %v1024 = vsel %vm263, %v1017, %v1022
      %v1025 = vsel %vm264, %v1016, %v1023
      %v1026 = vrot.slane %v1024, 6
      %v1027 = vrot.slane %v1025, 6
      %v1028 = vsel %vm283, %v1026, %v1027
      %v1029 = vsel %vm283, %v1027, %v1026
      %v1030 = vrot.slane %v1024, 2
      %v1031 = vrot.slane %v1025, 2
      %v1032 = vsel %vm288, %v1030, %v1031
      %v1033 = vsel %vm288, %v1031, %v1030
      %v1034 = vsel %vm297, %v1032, %v1024
      %v1035 = vsel %vm298, %v1033, %v1025
      %v1036 = vsel %vm293, %v1029, %v1034
      %v1037 = vsel %vm294, %v1028, %v1035
      %v1038 = vrot.slane %v1036, 4
      %v1039 = vrot.slane %v1037, 4
      %v1040 = vsel %vm313, %v1038, %v1039
      %v1041 = vsel %vm313, %v1039, %v1038
      %v1042 = vsel %vm322, %v1040, %v1036
      %v1043 = vsel %vm323, %v1041, %v1037
      %v1044 = vsel %vm318, %v1041, %v1042
      %v1045 = vsel %vm319, %v1040, %v1043
      %v1046 = vsel %vm340, %v1045, %v1044
      %v1047 = vsel %vm341, %v1044, %v1045
      %1048 = vrot.lane.b32.xlu0 %v1046, 8
      %v1049 = vpop.permute.xlu0 %1048
      %1050 = vrot.lane.b32.xlu0 %v1047, 8
      %v1051 = vpop.permute.xlu0 %1050
      %1052 = vrot.lane.b32.xlu0 %v1046, 120
      %v1053 = vpop.permute.xlu0 %1052
      %1054 = vrot.lane.b32.xlu0 %v1047, 120
      %v1055 = vpop.permute.xlu0 %1054
      %v1056 = vsel %vm363, %v1053, %v1046
      %v1057 = vsel %vm364, %v1055, %v1047
      %v1058 = vsel %vm359, %v1049, %v1056
      %v1059 = vsel %vm360, %v1051, %v1057
      %1060 = vrot.lane.b32.xlu0 %v1058, 16
      %v1061 = vpop.permute.xlu0 %1060
      %1062 = vrot.lane.b32.xlu0 %v1059, 16
      %v1063 = vpop.permute.xlu0 %1062
      %1064 = vrot.lane.b32.xlu0 %v1058, 112
      %v1065 = vpop.permute.xlu0 %1064
      %1066 = vrot.lane.b32.xlu0 %v1059, 112
      %v1067 = vpop.permute.xlu0 %1066
      %v1068 = vsel %vm387, %v1065, %v1058
      %v1069 = vsel %vm388, %v1067, %v1059
      %v1070 = vsel %vm383, %v1061, %v1068
      %v1071 = vsel %vm384, %v1063, %v1069
      %1072 = vrot.lane.b32.xlu0 %v1070, 32
      %v1073 = vpop.permute.xlu0 %1072
      %1074 = vrot.lane.b32.xlu0 %v1071, 32
      %v1075 = vpop.permute.xlu0 %1074
      %1076 = vrot.lane.b32.xlu0 %v1070, 96
      %v1077 = vpop.permute.xlu0 %1076
      %1078 = vrot.lane.b32.xlu0 %v1071, 96
      %v1079 = vpop.permute.xlu0 %1078
      %v1080 = vsel %vm411, %v1077, %v1070
      %v1081 = vsel %vm412, %v1079, %v1071
      %v1082 = vsel %vm407, %v1073, %v1080
      %v1083 = vsel %vm408, %v1075, %v1081
      %1084 = vrot.lane.b32.xlu0 %v1082, 64
      %v1085 = vpop.permute.xlu0 %1084
      %1086 = vrot.lane.b32.xlu0 %v1083, 64
      %v1087 = vpop.permute.xlu0 %1086
      %v1088 = vsel %vm428, %v1085, %v1082
      %v1089 = vsel %vm429, %v1087, %v1083
      %v1090 = vrot.slane %v1088, 7
      %v1091 = vrot.slane %v1089, 7
      %v1092 = vsel %vm253, %v1090, %v1091
      %v1093 = vsel %vm253, %v1091, %v1090
      %1094 = vrot.lane.b32.xlu0 %v1093, 8
      %v1095 = vpop.permute.xlu0 %1094
      %1096 = vrot.lane.b32.xlu0 %v1092, 8
      %v1097 = vpop.permute.xlu0 %1096
      %v1098 = vsel %vm440, %v1095, 0.0
      %v1099 = vsel %vm441, %v1097, 0.0
      %v1100 = vsel %vm243, %v1093, 0.0
      %v1101 = vsel %vm244, %v1092, 0.0
      %1102 = vrot.lane.b32.xlu0 %v1093, 120
      %v1103 = vpop.permute.xlu0 %1102
      %1104 = vrot.lane.b32.xlu0 %v1092, 120
      %v1105 = vpop.permute.xlu0 %1104
      %v1106 = vsel %vm450, %v1103, 0.0
      %v1107 = vsel %vm451, %v1105, 0.0
      %1108 = vrot.lane.b32.xlu0 %v1088, 8
      %v1109 = vpop.permute.xlu0 %1108
      %1110 = vrot.lane.b32.xlu0 %v1089, 8
      %v1111 = vpop.permute.xlu0 %1110
      %v1112 = vsel %vm345, %v1109, 0.0
      %v1113 = vsel %vm345, %v1111, 0.0
      %1114 = vrot.lane.b32.xlu0 %v1088, 120
      %v1115 = vpop.permute.xlu0 %1114
      %1116 = vrot.lane.b32.xlu0 %v1089, 120
      %v1117 = vpop.permute.xlu0 %1116
      %v1118 = vsel %vm347, %v1115, 0.0
      %v1119 = vsel %vm347, %v1117, 0.0
      %v1120 = vrot.slane %v1088, 1
      %v1121 = vrot.slane %v1089, 1
      %v1122 = vsel %vm258, %v1120, %v1121
      %v1123 = vsel %vm258, %v1121, %v1120
      %1124 = vrot.lane.b32.xlu0 %v1122, 8
      %v1125 = vpop.permute.xlu0 %1124
      %1126 = vrot.lane.b32.xlu0 %v1123, 8
      %v1127 = vpop.permute.xlu0 %1126
      %v1128 = vsel %vm474, %v1125, 0.0
      %v1129 = vsel %vm475, %v1127, 0.0
      %v1130 = vsel %vm247, %v1122, 0.0
      %v1131 = vsel %vm248, %v1123, 0.0
      %1132 = vrot.lane.b32.xlu0 %v1122, 120
      %v1133 = vpop.permute.xlu0 %1132
      %1134 = vrot.lane.b32.xlu0 %v1123, 120
      %v1135 = vpop.permute.xlu0 %1134
      %v1136 = vsel %vm484, %v1133, 0.0
      %v1137 = vsel %vm485, %v1135, 0.0
      %v1138 = vld [vmem:[%s3] sm:$0xff]
      %v1139 = vld [vmem:[%s3 + $0x8] sm:$0xff]
      %v1140 = vld [vmem:[%s3 + $0x10] sm:$0xff]
      %v1141 = vld [vmem:[%s3 + $0x18] sm:$0xff]
      %v1142 = vld [vmem:[%s3 + $0x20] sm:$0xff]
      %v1143 = vld [vmem:[%s3 + $0x28] sm:$0xff]
      %v1144 = vld [vmem:[%s3 + $0x30] sm:$0xff]
      %v1145 = vld [vmem:[%s3 + $0x38] sm:$0xff]
      %v1146 = vld [vmem:[%s3 + $0x40] sm:$0xff]
      %v1147 = vld [vmem:[%s3 + $0x48] sm:$0xff]
      %v1148 = vld [vmem:[%s3 + $0x50] sm:$0xff]
      %v1149 = vld [vmem:[%s3 + $0x58] sm:$0xff]
      %v1150 = vld [vmem:[%s3 + $0x60] sm:$0xff]
      %v1151 = vld [vmem:[%s3 + $0x68] sm:$0xff]
      %v1152 = vld [vmem:[%s3 + $0x70] sm:$0xff]
      %v1153 = vld [vmem:[%s3 + $0x78] sm:$0xff]
      %v1154 = vld [vmem:[%s3 + $0x80] sm:$0xff]
      %v1155 = vld [vmem:[%s3 + $0x88] sm:$0xff]
      %v1156 = vld [vmem:[%s3 + $0x90] sm:$0xff]
      %v1157 = vld [vmem:[%s3 + $0x98] sm:$0xff]
      %v1158 = vld [vmem:[%s3 + $0xa0] sm:$0xff]
      %v1159 = vld [vmem:[%s3 + $0xa8] sm:$0xff]
      %v1160 = vld [vmem:[%s3 + $0xb0] sm:$0xff]
      %v1161 = vld [vmem:[%s3 + $0xb8] sm:$0xff]
      %v1162 = vld [vmem:[%s3 + $0xc0] sm:$0xff]
      %v1163 = vld [vmem:[%s3 + $0xc8] sm:$0xff]
      %v1164 = vld [vmem:[%s3 + $0xd0] sm:$0xff]
      %v1165 = vld [vmem:[%s3 + $0xd8] sm:$0xff]
      %v1166 = vld [vmem:[%s3 + $0xe0] sm:$0xff]
      %v1167 = vld [vmem:[%s3 + $0xe8] sm:$0xff]
      %v1168 = vld [vmem:[%s3 + $0xf0] sm:$0xff]
      %v1169 = vld [vmem:[%s3 + $0xf8] sm:$0xff]
      %v1170 = vld [vmem:[%s3 + $0x100] sm:$0xff]
      %v1171 = vld [vmem:[%s3 + $0x108] sm:$0xff]
      %v1172 = vld [vmem:[%s3 + $0x110] sm:$0xff]
      %v1173 = vld [vmem:[%s3 + $0x118] sm:$0xff]
      %v1174 = vld [vmem:[%s3 + $0x120] sm:$0xff]
      %v1175 = vld [vmem:[%s3 + $0x128] sm:$0xff]
      %v1176 = vld [vmem:[%s3 + $0x130] sm:$0xff]
      %v1177 = vld [vmem:[%s3 + $0x138] sm:$0xff]
      %v1178 = vld [vmem:[%s3 + $0x140] sm:$0xff]
      %v1179 = vld [vmem:[%s3 + $0x148] sm:$0xff]
      %v1180 = vld [vmem:[%s3 + $0x150] sm:$0xff]
      %v1181 = vld [vmem:[%s3 + $0x158] sm:$0xff]
      %v1182 = vld [vmem:[%s3 + $0x160] sm:$0xff]
      %v1183 = vld [vmem:[%s3 + $0x168] sm:$0xff]
      %v1184 = vld [vmem:[%s3 + $0x170] sm:$0xff]
      %v1185 = vld [vmem:[%s3 + $0x178] sm:$0xff]
      %v1186 = vld [vmem:[%s3 + $0x180] sm:$0xff]
      %v1187 = vld [vmem:[%s3 + $0x188] sm:$0xff]
      %v1188 = vld [vmem:[%s3 + $0x190] sm:$0xff]
      %v1189 = vld [vmem:[%s3 + $0x198] sm:$0xff]
      %v1190 = vld [vmem:[%s3 + $0x1a0] sm:$0xff]
      %v1191 = vld [vmem:[%s3 + $0x1a8] sm:$0xff]
      %v1192 = vld [vmem:[%s3 + $0x1b0] sm:$0xff]
      %v1193 = vld [vmem:[%s3 + $0x1b8] sm:$0xff]
      %v1194 = vld [vmem:[%s3 + $0x1c0] sm:$0xff]
      %v1195 = vld [vmem:[%s3 + $0x1c8] sm:$0xff]
      %v1196 = vld [vmem:[%s3 + $0x1d0] sm:$0xff]
      %v1197 = vld [vmem:[%s3 + $0x1d8] sm:$0xff]
      %v1198 = vld [vmem:[%s3 + $0x1e0] sm:$0xff]
      %v1199 = vld [vmem:[%s3 + $0x1e8] sm:$0xff]
      %v1200 = vld [vmem:[%s3 + $0x1f0] sm:$0xff]
      %v1201 = vld [vmem:[%s3 + $0x1f8] sm:$0xff]
      %v1202 = vld [vmem:[%s3 + $0x200] sm:$0xff]
      %v1203 = vld [vmem:[%s3 + $0x208] sm:$0xff]
      %v1204 = vld [vmem:[%s3 + $0x210] sm:$0xff]
      %v1205 = vld [vmem:[%s3 + $0x218] sm:$0xff]
      %v1206 = vld [vmem:[%s3 + $0x220] sm:$0xff]
      %v1207 = vld [vmem:[%s3 + $0x228] sm:$0xff]
      %v1208 = vld [vmem:[%s3 + $0x230] sm:$0xff]
      %v1209 = vld [vmem:[%s3 + $0x238] sm:$0xff]
      %v1210 = vld [vmem:[%s3 + $0x240] sm:$0xff]
      %v1211 = vld [vmem:[%s3 + $0x248] sm:$0xff]
      %v1212 = vld [vmem:[%s3 + $0x250] sm:$0xff]
      %v1213 = vld [vmem:[%s3 + $0x258] sm:$0xff]
      %v1214 = vld [vmem:[%s3 + $0x260] sm:$0xff]
      %v1215 = vld [vmem:[%s3 + $0x268] sm:$0xff]
      %v1216 = vld [vmem:[%s3 + $0x270] sm:$0xff]
      %v1217 = vld [vmem:[%s3 + $0x278] sm:$0xff]
      %v1218 = vld [vmem:[%s3 + $0x280] sm:$0xff]
      %v1219 = vld [vmem:[%s3 + $0x288] sm:$0xff]
      %v1220 = vld [vmem:[%s3 + $0x290] sm:$0xff]
      %v1221 = vld [vmem:[%s3 + $0x298] sm:$0xff]
      %v1222 = vld [vmem:[%s3 + $0x2a0] sm:$0xff]
      %v1223 = vld [vmem:[%s3 + $0x2a8] sm:$0xff]
      %v1224 = vld [vmem:[%s3 + $0x2b0] sm:$0xff]
      %v1225 = vld [vmem:[%s3 + $0x2b8] sm:$0xff]
      %v1226 = vld [vmem:[%s3 + $0x2c0] sm:$0xff]
      %v1227 = vld [vmem:[%s3 + $0x2c8] sm:$0xff]
      %v1228 = vld [vmem:[%s3 + $0x2d0] sm:$0xff]
      %v1229 = vld [vmem:[%s3 + $0x2d8] sm:$0xff]
      %v1230 = vld [vmem:[%s3 + $0x2e0] sm:$0xff]
      %v1231 = vld [vmem:[%s3 + $0x2e8] sm:$0xff]
      %v1232 = vld [vmem:[%s3 + $0x2f0] sm:$0xff]
      %v1233 = vld [vmem:[%s3 + $0x2f8] sm:$0xff]
      %v1234 = vld [vmem:[%s3 + $0x300] sm:$0xff]
      %v1235 = vld [vmem:[%s3 + $0x308] sm:$0xff]
      %v1236 = vld [vmem:[%s3 + $0x310] sm:$0xff]
      %v1237 = vld [vmem:[%s3 + $0x318] sm:$0xff]
      %v1238 = vld [vmem:[%s3 + $0x320] sm:$0xff]
      %v1239 = vld [vmem:[%s3 + $0x328] sm:$0xff]
      %v1240 = vld [vmem:[%s3 + $0x330] sm:$0xff]
      %v1241 = vld [vmem:[%s3 + $0x338] sm:$0xff]
      %v1242 = vld [vmem:[%s3 + $0x340] sm:$0xff]
      %v1243 = vld [vmem:[%s3 + $0x348] sm:$0xff]
      %v1244 = vld [vmem:[%s3 + $0x350] sm:$0xff]
      %v1245 = vld [vmem:[%s3 + $0x358] sm:$0xff]
      %v1246 = vld [vmem:[%s3 + $0x360] sm:$0xff]
      %v1247 = vld [vmem:[%s3 + $0x368] sm:$0xff]
      %v1248 = vld [vmem:[%s3 + $0x370] sm:$0xff]
      %v1249 = vld [vmem:[%s3 + $0x378] sm:$0xff]
      %v1250 = vld [vmem:[%s3 + $0x380] sm:$0xff]
      %v1251 = vld [vmem:[%s3 + $0x388] sm:$0xff]
      %v1252 = vld [vmem:[%s3 + $0x390] sm:$0xff]
      %v1253 = vld [vmem:[%s3 + $0x398] sm:$0xff]
      %v1254 = vld [vmem:[%s3 + $0x3a0] sm:$0xff]
      %v1255 = vld [vmem:[%s3 + $0x3a8] sm:$0xff]
      %v1256 = vld [vmem:[%s3 + $0x3b0] sm:$0xff]
      %v1257 = vld [vmem:[%s3 + $0x3b8] sm:$0xff]
      %v1258 = vld [vmem:[%s3 + $0x3c0] sm:$0xff]
      %v1259 = vld [vmem:[%s3 + $0x3c8] sm:$0xff]
      %v1260 = vld [vmem:[%s3 + $0x3d0] sm:$0xff]
      %v1261 = vld [vmem:[%s3 + $0x3d8] sm:$0xff]
      %v1262 = vld [vmem:[%s3 + $0x3e0] sm:$0xff]
      %v1263 = vld [vmem:[%s3 + $0x3e8] sm:$0xff]
      %v1264 = vld [vmem:[%s3 + $0x3f0] sm:$0xff]
      %v1265 = vld [vmem:[%s3 + $0x3f8] sm:$0xff]
      %v1266 = vld [vmem:[%s3 + $0x400] sm:$0xff]
      %v1267 = vld [vmem:[%s3 + $0x408] sm:$0xff]
      %v1268 = vld [vmem:[%s3 + $0x410] sm:$0xff]
      %v1269 = vld [vmem:[%s3 + $0x418] sm:$0xff]
      %v1270 = vld [vmem:[%s3 + $0x420] sm:$0xff]
      %v1271 = vld [vmem:[%s3 + $0x428] sm:$0xff]
      %v1272 = vld [vmem:[%s3 + $0x430] sm:$0xff]
      %v1273 = vld [vmem:[%s3 + $0x438] sm:$0xff]
      %v1274 = vld [vmem:[%s3 + $0x440] sm:$0xff]
      %v1275 = vld [vmem:[%s3 + $0x448] sm:$0xff]
      %v1276 = vld [vmem:[%s3 + $0x450] sm:$0xff]
      %v1277 = vld [vmem:[%s3 + $0x458] sm:$0xff]
      %v1278 = vld [vmem:[%s3 + $0x460] sm:$0xff]
      %v1279 = vld [vmem:[%s3 + $0x468] sm:$0xff]
      %v1280 = vld [vmem:[%s3 + $0x470] sm:$0xff]
      %v1281 = vld [vmem:[%s3 + $0x478] sm:$0xff]
      %v1282 = vld [vmem:[%s4] sm:$0x1]
      %v1284 = vlaneseq
      %v1285 = vshrl.u32 %v1284, 7
      %v1286 = vsub.s32 0, %v1285
      %v1287 = vrot.slane %v1282, %v1286
      %1289 = vmatprep.subr.mxu0 0.0
      %1290 = vmatpush1.msra.mxu0 %v1138
      %1291 = vmatprep.subr.mxu0 0.0
      %1292 = vmatpush1.msra.mxu0 %v1139
      %1293 = vmatprep.subr.mxu0 0.0
      %1294 = vmatpush1.msra.mxu0 %v1140
      %1295 = vmatprep.subr.mxu0 0.0
      %1296 = vmatpush1.msra.mxu0 %v1141
      %1297 = vmatprep.subr.mxu0 0.0
      %1298 = vmatpush1.msra.mxu0 %v1142
      %1299 = vmatprep.subr.mxu0 0.0
      %1300 = vmatpush1.msra.mxu0 %v1143
      %1301 = vmatprep.subr.mxu0 0.0
      %1302 = vmatpush1.msra.mxu0 %v1144
      %1303 = vmatprep.subr.mxu0 0.0
      %1304 = vmatpush1.msra.mxu0 %v1145
      %1305 = vmatprep.subr.mxu0 0.0
      %1306 = vmatpush1.msra.mxu0 %v1146
      %1307 = vmatprep.subr.mxu0 0.0
      %1308 = vmatpush1.msra.mxu0 %v1147
      %1309 = vmatprep.subr.mxu0 0.0
      %1310 = vmatpush1.msra.mxu0 %v1148
      %1311 = vmatprep.subr.mxu0 0.0
      %1312 = vmatpush1.msra.mxu0 %v1149
      %1313 = vmatprep.subr.mxu0 0.0
      %1314 = vmatpush1.msra.mxu0 %v1150
      %1315 = vmatprep.subr.mxu0 0.0
      %1316 = vmatpush1.msra.mxu0 %v1151
      %1317 = vmatprep.subr.mxu0 0.0
      %1318 = vmatpush1.msra.mxu0 %v1152
      %1319 = vmatprep.subr.mxu0 0.0
      %1320 = vmatpush1.msra.mxu0 %v1153
      %1321 = vmatprep.subr.mxu0 0.0
      %1322 = vmatpush1.msra.mxu0 %v1154
      %1323 = vmatprep.subr.mxu0 0.0
      %1324 = vmatpush1.msra.mxu0 %v1155
      %1325 = vmatprep.subr.mxu0 0.0
      %1326 = vmatpush1.msra.mxu0 %v1156
      %1327 = vmatprep.subr.mxu0 0.0
      %1328 = vmatpush1.msra.mxu0 %v1157
      %1329 = vmatprep.subr.mxu0 0.0
      %1330 = vmatpush1.msra.mxu0 %v1158
      %1331 = vmatprep.subr.mxu0 0.0
      %1332 = vmatpush1.msra.mxu0 %v1159
      %1333 = vmatprep.subr.mxu0 0.0
      %1334 = vmatpush1.msra.mxu0 %v1160
      %1335 = vmatprep.subr.mxu0 0.0
      %1336 = vmatpush1.msra.mxu0 %v1161
      %1337 = vmatprep.subr.mxu0 0.0
      %1338 = vmatpush1.msra.mxu0 %v1162
      %1339 = vmatprep.subr.mxu0 0.0
      %1340 = vmatpush1.msra.mxu0 %v1163
      %1341 = vmatprep.subr.mxu0 0.0
      %1342 = vmatpush1.msra.mxu0 %v1164
      %1343 = vmatprep.subr.mxu0 0.0
      %1344 = vmatpush1.msra.mxu0 %v1165
      %1345 = vmatprep.subr.mxu0 0.0
      %1346 = vmatpush1.msra.mxu0 %v1166
      %1347 = vmatprep.subr.mxu0 0.0
      %1348 = vmatpush1.msra.mxu0 %v1167
      %1349 = vmatprep.subr.mxu0 0.0
      %1350 = vmatpush1.msra.mxu0 %v1168
      %1351 = vmatprep.subr.mxu0 0.0
      %1352 = vmatpush1.msra.mxu0 %v1169
      %1353 = vmatprep.mubr.f32.mxu0 %v1100
      %1354 = vmatmul.mubr.f32.gmra.mrb[0].mxu0 %v1098
      %v1355 = vpop.f32.mrb[0].mxu0
      %v1356 = vadd.f32 %v1287, %v1355
      %v1357 = vpop.f32.mrb[0].mxu0
      %1358 = vmatprep.mubr.f32.mxu0 %v1101
      %1359 = vmatmul.mubr.f32.gmra.mrb[0].mxu0 %v1099
      %v1360 = vpop.f32.mrb[0].mxu0
      %v1361 = vadd.f32 %v1287, %v1360
      %v1362 = vpop.f32.mrb[0].mxu0
      %1363 = vdwg.mxu0
      %1364 = vmatprep.subr.mxu0 0.0
      %1365 = vmatpush1.msra.mxu0 %v1170
      %1366 = vmatprep.subr.mxu0 0.0
      %1367 = vmatpush1.msra.mxu0 %v1171
      %1368 = vmatprep.subr.mxu0 0.0
      %1369 = vmatpush1.msra.mxu0 %v1172
      %1370 = vmatprep.subr.mxu0 0.0
      %1371 = vmatpush1.msra.mxu0 %v1173
      %1372 = vmatprep.subr.mxu0 0.0
      %1373 = vmatpush1.msra.mxu0 %v1174
      %1374 = vmatprep.subr.mxu0 0.0
      %1375 = vmatpush1.msra.mxu0 %v1175
      %1376 = vmatprep.subr.mxu0 0.0
      %1377 = vmatpush1.msra.mxu0 %v1176
      %1378 = vmatprep.subr.mxu0 0.0
      %1379 = vmatpush1.msra.mxu0 %v1177
      %1380 = vmatprep.subr.mxu0 0.0
      %1381 = vmatpush1.msra.mxu0 %v1178
      %1382 = vmatprep.subr.mxu0 0.0
      %1383 = vmatpush1.msra.mxu0 %v1179
      %1384 = vmatprep.subr.mxu0 0.0
      %1385 = vmatpush1.msra.mxu0 %v1180
      %1386 = vmatprep.subr.mxu0 0.0
      %1387 = vmatpush1.msra.mxu0 %v1181
      %1388 = vmatprep.subr.mxu0 0.0
      %1389 = vmatpush1.msra.mxu0 %v1182
      %1390 = vmatprep.subr.mxu0 0.0
      %1391 = vmatpush1.msra.mxu0 %v1183
      %1392 = vmatprep.subr.mxu0 0.0
      %1393 = vmatpush1.msra.mxu0 %v1184
      %1394 = vmatprep.subr.mxu0 0.0
      %1395 = vmatpush1.msra.mxu0 %v1185
      %1396 = vmatprep.subr.mxu0 0.0
      %1397 = vmatpush1.msra.mxu0 %v1186
      %1398 = vmatprep.subr.mxu0 0.0
      %1399 = vmatpush1.msra.mxu0 %v1187
      %1400 = vmatprep.subr.mxu0 0.0
      %1401 = vmatpush1.msra.mxu0 %v1188
      %1402 = vmatprep.subr.mxu0 0.0
      %1403 = vmatpush1.msra.mxu0 %v1189
      %1404 = vmatprep.subr.mxu0 0.0
      %1405 = vmatpush1.msra.mxu0 %v1190
      %1406 = vmatprep.subr.mxu0 0.0
      %1407 = vmatpush1.msra.mxu0 %v1191
      %1408 = vmatprep.subr.mxu0 0.0
      %1409 = vmatpush1.msra.mxu0 %v1192
      %1410 = vmatprep.subr.mxu0 0.0
      %1411 = vmatpush1.msra.mxu0 %v1193
      %1412 = vmatprep.subr.mxu0 0.0
      %1413 = vmatpush1.msra.mxu0 %v1194
      %1414 = vmatprep.subr.mxu0 0.0
      %1415 = vmatpush1.msra.mxu0 %v1195
      %1416 = vmatprep.subr.mxu0 0.0
      %1417 = vmatpush1.msra.mxu0 %v1196
      %1418 = vmatprep.subr.mxu0 0.0
      %1419 = vmatpush1.msra.mxu0 %v1197
      %1420 = vmatprep.subr.mxu0 0.0
      %1421 = vmatpush1.msra.mxu0 %v1198
      %1422 = vmatprep.subr.mxu0 0.0
      %1423 = vmatpush1.msra.mxu0 %v1199
      %1424 = vmatprep.subr.mxu0 0.0
      %1425 = vmatpush1.msra.mxu0 %v1200
      %1426 = vmatprep.subr.mxu0 0.0
      %1427 = vmatpush1.msra.mxu0 %v1201
      %1428 = vmatprep.mubr.f32.mxu0 %v1112
      %1429 = vmatmul.mubr.f32.gmra.mrb[0].mxu0 %v1106
      %v1430 = vpop.f32.mrb[0].mxu0
      %v1431 = vadd.f32 %v1356, %v1430
      %v1432 = vpop.f32.mrb[0].mxu0
      %1433 = vmatprep.mubr.f32.mxu0 %v1113
      %1434 = vmatmul.mubr.f32.gmra.mrb[0].mxu0 %v1107
      %v1435 = vpop.f32.mrb[0].mxu0
      %v1436 = vadd.f32 %v1361, %v1435
      %v1437 = vpop.f32.mrb[0].mxu0
      %1438 = vdwg.mxu0
      %1439 = vmatprep.subr.mxu0 0.0
      %1440 = vmatpush1.msra.mxu0 %v1202
      %1441 = vmatprep.subr.mxu0 0.0
      %1442 = vmatpush1.msra.mxu0 %v1203
      %1443 = vmatprep.subr.mxu0 0.0
      %1444 = vmatpush1.msra.mxu0 %v1204
      %1445 = vmatprep.subr.mxu0 0.0
      %1446 = vmatpush1.msra.mxu0 %v1205
      %1447 = vmatprep.subr.mxu0 0.0
      %1448 = vmatpush1.msra.mxu0 %v1206
      %1449 = vmatprep.subr.mxu0 0.0
      %1450 = vmatpush1.msra.mxu0 %v1207
      %1451 = vmatprep.subr.mxu0 0.0
      %1452 = vmatpush1.msra.mxu0 %v1208
      %1453 = vmatprep.subr.mxu0 0.0
      %1454 = vmatpush1.msra.mxu0 %v1209
      %1455 = vmatprep.subr.mxu0 0.0
      %1456 = vmatpush1.msra.mxu0 %v1210
      %1457 = vmatprep.subr.mxu0 0.0
      %1458 = vmatpush1.msra.mxu0 %v1211
      %1459 = vmatprep.subr.mxu0 0.0
      %1460 = vmatpush1.msra.mxu0 %v1212
      %1461 = vmatprep.subr.mxu0 0.0
      %1462 = vmatpush1.msra.mxu0 %v1213
      %1463 = vmatprep.subr.mxu0 0.0
      %1464 = vmatpush1.msra.mxu0 %v1214
      %1465 = vmatprep.subr.mxu0 0.0
      %1466 = vmatpush1.msra.mxu0 %v1215
      %1467 = vmatprep.subr.mxu0 0.0
      %1468 = vmatpush1.msra.mxu0 %v1216
      %1469 = vmatprep.subr.mxu0 0.0
      %1470 = vmatpush1.msra.mxu0 %v1217
      %1471 = vmatprep.subr.mxu0 0.0
      %1472 = vmatpush1.msra.mxu0 %v1218
      %1473 = vmatprep.subr.mxu0 0.0
      %1474 = vmatpush1.msra.mxu0 %v1219
      %1475 = vmatprep.subr.mxu0 0.0
      %1476 = vmatpush1.msra.mxu0 %v1220
      %1477 = vmatprep.subr.mxu0 0.0
      %1478 = vmatpush1.msra.mxu0 %v1221
      %1479 = vmatprep.subr.mxu0 0.0
      %1480 = vmatpush1.msra.mxu0 %v1222
      %1481 = vmatprep.subr.mxu0 0.0
      %1482 = vmatpush1.msra.mxu0 %v1223
      %1483 = vmatprep.subr.mxu0 0.0
      %1484 = vmatpush1.msra.mxu0 %v1224
      %1485 = vmatprep.subr.mxu0 0.0
      %1486 = vmatpush1.msra.mxu0 %v1225
      %1487 = vmatprep.subr.mxu0 0.0
      %1488 = vmatpush1.msra.mxu0 %v1226
      %1489 = vmatprep.subr.mxu0 0.0
      %1490 = vmatpush1.msra.mxu0 %v1227
      %1491 = vmatprep.subr.mxu0 0.0
      %1492 = vmatpush1.msra.mxu0 %v1228
      %1493 = vmatprep.subr.mxu0 0.0
      %1494 = vmatpush1.msra.mxu0 %v1229
      %1495 = vmatprep.subr.mxu0 0.0
      %1496 = vmatpush1.msra.mxu0 %v1230
      %1497 = vmatprep.subr.mxu0 0.0
      %1498 = vmatpush1.msra.mxu0 %v1231
      %1499 = vmatprep.subr.mxu0 0.0
      %1500 = vmatpush1.msra.mxu0 %v1232
      %1501 = vmatprep.subr.mxu0 0.0
      %1502 = vmatpush1.msra.mxu0 %v1233
      %1503 = vmatprep.mubr.f32.mxu0 %v1118
      %1504 = vmatmul.mubr.f32.gmra.mrb[0].mxu0 %v1088
      %v1505 = vpop.f32.mrb[0].mxu0
      %v1506 = vadd.f32 %v1431, %v1505
      %v1507 = vpop.f32.mrb[0].mxu0
      %1508 = vmatprep.mubr.f32.mxu0 %v1119
      %1509 = vmatmul.mubr.f32.gmra.mrb[0].mxu0 %v1089
      %v1510 = vpop.f32.mrb[0].mxu0
      %v1511 = vadd.f32 %v1436, %v1510
      %v1512 = vpop.f32.mrb[0].mxu0
      %1513 = vdwg.mxu0
      %1514 = vmatprep.subr.mxu0 0.0
      %1515 = vmatpush1.msra.mxu0 %v1234
      %1516 = vmatprep.subr.mxu0 0.0
      %1517 = vmatpush1.msra.mxu0 %v1235
      %1518 = vmatprep.subr.mxu0 0.0
      %1519 = vmatpush1.msra.mxu0 %v1236
      %1520 = vmatprep.subr.mxu0 0.0
      %1521 = vmatpush1.msra.mxu0 %v1237
      %1522 = vmatprep.subr.mxu0 0.0
      %1523 = vmatpush1.msra.mxu0 %v1238
      %1524 = vmatprep.subr.mxu0 0.0
      %1525 = vmatpush1.msra.mxu0 %v1239
      %1526 = vmatprep.subr.mxu0 0.0
      %1527 = vmatpush1.msra.mxu0 %v1240
      %1528 = vmatprep.subr.mxu0 0.0
      %1529 = vmatpush1.msra.mxu0 %v1241
      %1530 = vmatprep.subr.mxu0 0.0
      %1531 = vmatpush1.msra.mxu0 %v1242
      %1532 = vmatprep.subr.mxu0 0.0
      %1533 = vmatpush1.msra.mxu0 %v1243
      %1534 = vmatprep.subr.mxu0 0.0
      %1535 = vmatpush1.msra.mxu0 %v1244
      %1536 = vmatprep.subr.mxu0 0.0
      %1537 = vmatpush1.msra.mxu0 %v1245
      %1538 = vmatprep.subr.mxu0 0.0
      %1539 = vmatpush1.msra.mxu0 %v1246
      %1540 = vmatprep.subr.mxu0 0.0
      %1541 = vmatpush1.msra.mxu0 %v1247
      %1542 = vmatprep.subr.mxu0 0.0
      %1543 = vmatpush1.msra.mxu0 %v1248
      %1544 = vmatprep.subr.mxu0 0.0
      %1545 = vmatpush1.msra.mxu0 %v1249
      %1546 = vmatprep.subr.mxu0 0.0
      %1547 = vmatpush1.msra.mxu0 %v1250
      %1548 = vmatprep.subr.mxu0 0.0
      %1549 = vmatpush1.msra.mxu0 %v1251
      %1550 = vmatprep.subr.mxu0 0.0
      %1551 = vmatpush1.msra.mxu0 %v1252
      %1552 = vmatprep.subr.mxu0 0.0
      %1553 = vmatpush1.msra.mxu0 %v1253
      %1554 = vmatprep.subr.mxu0 0.0
      %1555 = vmatpush1.msra.mxu0 %v1254
      %1556 = vmatprep.subr.mxu0 0.0
      %1557 = vmatpush1.msra.mxu0 %v1255
      %1558 = vmatprep.subr.mxu0 0.0
      %1559 = vmatpush1.msra.mxu0 %v1256
      %1560 = vmatprep.subr.mxu0 0.0
      %1561 = vmatpush1.msra.mxu0 %v1257
      %1562 = vmatprep.subr.mxu0 0.0
      %1563 = vmatpush1.msra.mxu0 %v1258
      %1564 = vmatprep.subr.mxu0 0.0
      %1565 = vmatpush1.msra.mxu0 %v1259
      %1566 = vmatprep.subr.mxu0 0.0
      %1567 = vmatpush1.msra.mxu0 %v1260
      %1568 = vmatprep.subr.mxu0 0.0
      %1569 = vmatpush1.msra.mxu0 %v1261
      %1570 = vmatprep.subr.mxu0 0.0
      %1571 = vmatpush1.msra.mxu0 %v1262
      %1572 = vmatprep.subr.mxu0 0.0
      %1573 = vmatpush1.msra.mxu0 %v1263
      %1574 = vmatprep.subr.mxu0 0.0
      %1575 = vmatpush1.msra.mxu0 %v1264
      %1576 = vmatprep.subr.mxu0 0.0
      %1577 = vmatpush1.msra.mxu0 %v1265
      %1578 = vmatprep.mubr.f32.mxu0 %v1130
      %1579 = vmatmul.mubr.f32.gmra.mrb[0].mxu0 %v1128
      %v1580 = vpop.f32.mrb[0].mxu0
      %v1581 = vadd.f32 %v1506, %v1580
      %v1582 = vpop.f32.mrb[0].mxu0
      %1583 = vmatprep.mubr.f32.mxu0 %v1131
      %1584 = vmatmul.mubr.f32.gmra.mrb[0].mxu0 %v1129
      %v1585 = vpop.f32.mrb[0].mxu0
      %v1586 = vadd.f32 %v1511, %v1585
      %v1587 = vpop.f32.mrb[0].mxu0
      %1588 = vdwg.mxu0
      %1589 = vmatprep.subr.mxu0 0.0
      %1590 = vmatpush1.msra.mxu0 %v1266
      %1591 = vmatprep.subr.mxu0 0.0
      %1592 = vmatpush1.msra.mxu0 %v1267
      %1593 = vmatprep.subr.mxu0 0.0
      %1594 = vmatpush1.msra.mxu0 %v1268
      %1595 = vmatprep.subr.mxu0 0.0
      %1596 = vmatpush1.msra.mxu0 %v1269
      %1597 = vmatprep.subr.mxu0 0.0
      %1598 = vmatpush1.msra.mxu0 %v1270
      %1599 = vmatprep.subr.mxu0 0.0
      %1600 = vmatpush1.msra.mxu0 %v1271
      %1601 = vmatprep.subr.mxu0 0.0
      %1602 = vmatpush1.msra.mxu0 %v1272
      %1603 = vmatprep.subr.mxu0 0.0
      %1604 = vmatpush1.msra.mxu0 %v1273
      %1605 = vmatprep.subr.mxu0 0.0
      %1606 = vmatpush1.msra.mxu0 %v1274
      %1607 = vmatprep.subr.mxu0 0.0
      %1608 = vmatpush1.msra.mxu0 %v1275
      %1609 = vmatprep.subr.mxu0 0.0
      %1610 = vmatpush1.msra.mxu0 %v1276
      %1611 = vmatprep.subr.mxu0 0.0
      %1612 = vmatpush1.msra.mxu0 %v1277
      %1613 = vmatprep.subr.mxu0 0.0
      %1614 = vmatpush1.msra.mxu0 %v1278
      %1615 = vmatprep.subr.mxu0 0.0
      %1616 = vmatpush1.msra.mxu0 %v1279
      %1617 = vmatprep.subr.mxu0 0.0
      %1618 = vmatpush1.msra.mxu0 %v1280
      %1619 = vmatprep.subr.mxu0 0.0
      %1620 = vmatpush1.msra.mxu0 %v1281
      %1621 = vmatprep.subr.mxu0 0.0
      %1622 = vmatpush1.msra.mxu0 0.0
      %1623 = vmatprep.subr.mxu0 0.0
      %1624 = vmatpush1.msra.mxu0 0.0
      %1625 = vmatprep.subr.mxu0 0.0
      %1626 = vmatpush1.msra.mxu0 0.0
      %1627 = vmatprep.subr.mxu0 0.0
      %1628 = vmatpush1.msra.mxu0 0.0
      %1629 = vmatprep.subr.mxu0 0.0
      %1630 = vmatpush1.msra.mxu0 0.0
      %1631 = vmatprep.subr.mxu0 0.0
      %1632 = vmatpush1.msra.mxu0 0.0
      %1633 = vmatprep.subr.mxu0 0.0
      %1634 = vmatpush1.msra.mxu0 0.0
      %1635 = vmatprep.subr.mxu0 0.0
      %1636 = vmatpush1.msra.mxu0 0.0
      %1637 = vmatprep.subr.mxu0 0.0
      %1638 = vmatpush1.msra.mxu0 0.0
      %1639 = vmatprep.subr.mxu0 0.0
      %1640 = vmatpush1.msra.mxu0 0.0
      %1641 = vmatprep.subr.mxu0 0.0
      %1642 = vmatpush1.msra.mxu0 0.0
      %1643 = vmatprep.subr.mxu0 0.0
      %1644 = vmatpush1.msra.mxu0 0.0
      %1645 = vmatprep.subr.mxu0 0.0
      %1646 = vmatpush1.msra.mxu0 0.0
      %1647 = vmatprep.subr.mxu0 0.0
      %1648 = vmatpush1.msra.mxu0 0.0
      %1649 = vmatprep.subr.mxu0 0.0
      %1650 = vmatpush1.msra.mxu0 0.0
      %1651 = vmatprep.subr.mxu0 0.0
      %1652 = vmatpush1.msra.mxu0 0.0
      %1653 = vmatprep.mubr.f32.mxu0 0.0
      %1654 = vmatmul.mubr.f32.gmra.mrb[0].mxu0 %v1136
      %v1655 = vpop.f32.mrb[0].mxu0
      %v1656 = vadd.f32 %v1581, %v1655
      %v1657 = vpop.f32.mrb[0].mxu0
      %1658 = vmatprep.mubr.f32.mxu0 0.0
      %1659 = vmatmul.mubr.f32.gmra.mrb[0].mxu0 %v1137
      %v1660 = vpop.f32.mrb[0].mxu0
      %v1661 = vadd.f32 %v1586, %v1660
      %v1662 = vpop.f32.mrb[0].mxu0
      %1663 = vdwg.mxu0
      %1664 = vst [vmem:[%s226] sm:$0xff] %v1656
      %1665 = vst [vmem:[%s226 + $0x8] sm:$0xff] %v1661
      %s1666 = smul.u32 2, %s16
      %p1667 = scmp.lt.s32.totalorder %s1666, 3
      %s1668 = scalar_select %p1667, %s1666, 3
      %s1669 = smul.addr %s1668, 8
      %s1670 = scalar_lea.vmem %s5, %s1669
      // Predicated region
      $region41: #{g2conv2d4.1} parent=39 // pred_check
        %p1671 = pneg %p144
      $region42: #{g2conv2d4.1} parent=39 // pred_check_branch
        %1673 = sbr.rel (%p1671) target = $region44
      $region43: #{g2conv2d4.1} parent=39 // pred_region
        %s1674 = smul.u32 2, %s16
      $region44: #{g2conv2d4.1} parent=39 // pred_fallthru
        _
    $region40: #{g2conv2d4.1} parent=5 // pred_fallthru
      _
    %p1675 = scmp.le.s32.totalorder 2, %s11
    // Predicated region
    $region45: #{g2conv2d4.1} parent=5 // pred_check
      %p1676 = pneg %p1675
    $region46: #{g2conv2d4.1} parent=5 // pred_check_branch
      %1678 = sbr.rel (%p1676) target = $region48
    $region47: #{g2conv2d4.1} parent=5 // pred_region
      %s1679 = ssub.s32 %s11, 2
      // Predicated region
      $region49: #{g2conv2d4.1} parent=47 // pred_check
        %p1680 = pneg %p150
      $region50: #{g2conv2d4.1} parent=47 // pred_check_branch
        %1682 = sbr.rel (%p1680) target = $region52
      $region51: #{g2conv2d4.1} parent=47 // pred_region
        %s1683 = smul.u32 2, %s17
        %p1684 = scmp.lt.s32.totalorder %s1683, 3
        %s1685 = scalar_select %p1684, %s1683, 3
        %s1686 = smul.addr %s1685, 8
        %s1687 = scalar_lea.vmem %s5, %s1686
      $region52: #{g2conv2d4.1} parent=47 // pred_fallthru
        _
    $region48: #{g2conv2d4.1} parent=5 // pred_fallthru
      _
  $region6: #{g2conv2d4.1} parent=0 // loop_footer
    %s15 = sadd.s32 1, %s11
  $region7: #{g2conv2d4.1} parent=0 // loop_footer_branch
    %10 = sbr.rel target = $region3
  $region8: #{g2conv2d4.1} parent=0 // loop_exit
    _

</llo_original>
